<compile_context>
chip_gen: v5e
topology: v5e:2x2
jax: 0.10.0
libtpu: 0.0.40
codegen_flags: <defaults>
</compile_context>

<pallas_src>
import math

import jax
import jax.numpy as jnp
from jax.experimental import pallas as pl
from jax.experimental.pallas import tpu as pltpu

LN_EPS = 1e-5  # torch.nn.LayerNorm default


def _layernorm(v, g, b):
    # v: (rows, C); g, b: (1, C).  One-pass stats: var = E[x^2] - mean^2.
    mean = jnp.mean(v, axis=-1, keepdims=True)
    mean_sq = jnp.mean(v * v, axis=-1, keepdims=True)
    var = jnp.maximum(mean_sq - mean * mean, 0.0)
    return (v - mean) * jax.lax.rsqrt(var + LN_EPS) * g + b


def encoder_block_kernel(x_ref, y_ref, *refs):
    (ln1_g, ln1_b,
     qkv_w, qkv_b, e_w, e_b, oe_w, oe_b, on_w, on_b,
     ln3_g, ln3_b, ln4_g, ln4_b,
     m1w1, m1b1, m1w2, m1b2,
     m2w1, m2b1, m2w2, m2b2,
     ln5_g, ln5_b, ln6_g, ln6_b) = refs[:26]
    node_out_ref, edge_out_ref = refs[26:28]
    x1_scr, q_scr, k_scr, v_scr = refs[28:32]

    BB, N, C = x_ref.shape                      # batch-block of all nodes
    TI = node_out_ref.shape[1]                  # query-row tile

    def linear(a, w_ref, b_ref):
        return jnp.dot(a, w_ref[...], preferred_element_type=jnp.float32) + b_ref[...]

    i = pl.program_id(1)

    # ---- per-batch-block work: full-node LN + fused q/k/v projection -------
    # Done once (first row tile) and cached in VMEM scratch; every remaining
    # row tile of this batch block reuses it (axis 1 is "arbitrary").
    @pl.when(i == 0)
    def _():
        x1 = _layernorm(x_ref[...].reshape(BB * N, C), ln1_g[...], ln1_b[...])
        qkv = linear(x1, qkv_w, qkv_b)                       # (BB*N, 3C)
        x1_scr[...] = x1.reshape(BB, N, C)
        q_scr[...] = qkv[:, :C].reshape(BB, N, C)            # scale pre-folded
        k_scr[...] = qkv[:, C:2 * C].reshape(BB, N, C)
        v_scr[...] = qkv[:, 2 * C:].reshape(BB, N, C)

    row0 = i * TI
    if TI % 8 == 0:
        row0 = pl.multiple_of(row0, 8)

    x1_rows = x1_scr[:, pl.ds(row0, TI), :].reshape(BB * TI, C)
    q = q_scr[:, pl.ds(row0, TI), :].reshape(BB, TI, 1, C)
    k = k_scr[...].reshape(BB, 1, N, C)
    v = v_scr[...].reshape(BB, 1, N, C)

    # ---- edge path (per row tile) ------------------------------------------
    y_flat = y_ref[...].reshape(BB * TI * N, C)
    e = linear(y_flat, e_w, e_b).reshape(BB, TI, N, C)

    # attn[b,i,j,c] = q[b,i,c]*k[b,j,c]/sqrt(d_k) * (e[b,i,j,c]+1)*e[b,i,j,c]
    # (1/sqrt(d_k) folded into q's weights by the wrapper)
    attn = (q * k) * (e + 1.0) * e                           # (BB, TI, N, C)

    edge_pre = linear(attn.reshape(BB * TI * N, C), oe_w, oe_b)   # out_e

    # softmax over the key-node axis (PyTorch dim=2)
    amax = jnp.max(attn, axis=2, keepdims=True)
    p = jnp.exp(attn - amax)
    denom = jnp.sum(p, axis=2, keepdims=True)
    attn_sm = p * pl.reciprocal(denom, approx=True)

    node_ctx = jnp.sum(attn_sm * v, axis=2)                  # (BB, TI, C)
    node_pre = linear(node_ctx.reshape(BB * TI, C), on_w, on_b)   # out_n

    # residuals + ln3 / ln4
    x2 = _layernorm(x1_rows + node_pre, ln3_g[...], ln3_b[...])        # (BB*TI, C)
    y2 = _layernorm(y_flat + edge_pre, ln4_g[...], ln4_b[...])         # (BB*TI*N, C)

    # MLPs (dropout rate 0 -> no-op) + final LNs
    h1 = jnp.maximum(linear(x2, m1w1, m1b1), 0.0)
    x_out = _layernorm(x2 + linear(h1, m1w2, m1b2), ln5_g[...], ln5_b[...])

    h2 = jnp.maximum(linear(y2, m2w1, m2b1), 0.0)
    y_out = _layernorm(y2 + linear(h2, m2w2, m2b2), ln6_g[...], ln6_b[...])

    node_out_ref[...] = x_out.reshape(BB, TI, C).astype(node_out_ref.dtype)
    edge_out_ref[...] = y_out.reshape(BB, TI * N, C).astype(edge_out_ref.dtype)


def _prepare_params(params, heads):
    """Fold the attention scale into q and fuse q/k/v into one (C, 3C) matmul."""
    (ln1_g, ln1_b, qw, qb, kw, kb, vw, vb, ew, eb, oew, oeb, onw, onb,
     ln3_g, ln3_b, ln4_g, ln4_b, m1w1, m1b1, m1w2, m1b2,
     m2w1, m2b1, m2w2, m2b2, ln5_g, ln5_b, ln6_g, ln6_b) = params
    C = qw.shape[0]
    scale = 1.0 / math.sqrt(C // heads)
    qkv_w = jnp.concatenate([qw * scale, kw, vw], axis=1)    # (C, 3C)
    qkv_b = jnp.concatenate([qb * scale, kb, vb], axis=1)    # (1, 3C)
    return [ln1_g, ln1_b, qkv_w, qkv_b, ew, eb, oew, oeb, onw, onb,
            ln3_g, ln3_b, ln4_g, ln4_b, m1w1, m1b1, m1w2, m1b2,
            m2w1, m2b1, m2w2, m2b2, ln5_g, ln5_b, ln6_g, ln6_b]


def _vmem_estimate(bb, ti, N, C, hid, param_bytes):
    """Rough f32 VMEM bytes for one grid step (I/O buffers + scratch + temps)."""
    f = 4
    edge = bb * ti * N * C * f
    node_full = bb * N * C * f
    node_tile = bb * ti * C * f
    io = 2 * (edge + node_full) + 2 * (edge + node_tile)   # double-buffered in/out
    scratch = 4 * node_full                                # x1, q, k, v (single buf)
    inter = edge * (8 + max(1, hid // C)) + node_full * 4 \
        + node_tile * (5 + max(1, hid // C))
    return io + scratch + inter + 2 * param_bytes


def _choose_tiles(B, N, C, hid, param_bytes, budget, max_bb):
    """Largest (batch_block, row_tile) that fits the VMEM budget."""
    def divisors(n):
        return [d for d in range(n, 0, -1) if n % d == 0]
    ti_cands = [d for d in divisors(N) if d == N or d % 8 == 0]
    bb_cands = [d for d in divisors(B) if d <= max_bb] or [1]
    for bb in bb_cands:
        for ti in ti_cands:
            if _vmem_estimate(bb, ti, N, C, hid, param_bytes) <= budget:
                return bb, ti
    return bb_cands[-1], ti_cands[-1]


def _tpu_config():
    """Return (vmem_capacity_bytes, assume_two_tensorcores)."""
    vmem_cap = None
    try:
        info = pltpu.get_tpu_info()
        cap = getattr(info, "vmem_capacity_bytes", None)
        if cap:
            vmem_cap = int(cap)
    except Exception:
        vmem_cap = None
    if vmem_cap is None:
        vmem_cap = 64 << 20          # be v7x-safe when the query is unavailable
    # v7x: 64 MiB VMEM per TC, 2 TCs per chip -> keep a >=2-extent parallel axis.
    multi_tc = vmem_cap <= (80 << 20)
    return vmem_cap, multi_tc


def encoder_block(x, y, params, heads, *, batch_block=None, tile_i=None):
    B, N, C = x.shape
    hid = params[18].shape[1]                  # mlp hidden width

    prepped = _prepare_params(params, heads)
    param_bytes = sum(int(p.size) * p.dtype.itemsize for p in prepped)

    vmem_cap, multi_tc = _tpu_config()
    budget = int(vmem_cap * 0.6)               # ~38 MiB on v7x, ~76 MiB on v5e/v6e
    max_bb = max(1, B // 2) if (multi_tc and B >= 2) else B

    bb, ti = _choose_tiles(B, N, C, hid, param_bytes, budget, max_bb)
    if batch_block is not None:
        bb = batch_block
    if tile_i is not None:
        ti = tile_i
    assert B % bb == 0 and N % ti == 0

    # Flatten the edge tensor in the wrapper (free at XLA level) so row tiles
    # are simple blocks and the kernel never reshapes across the N*N dim.
    y_flat = y.reshape(B, N * N, C)

    grid = (B // bb, N // ti)

    in_specs = [
        pl.BlockSpec((bb, N, C), lambda b, i: (b, 0, 0)),        # all nodes per batch blk
        pl.BlockSpec((bb, ti * N, C), lambda b, i: (b, i, 0)),   # edge row tile
    ]
    # Weights / biases / LN params: grid-invariant block 0 every step (Pallas
    # skips re-DMA when the block index does not change).
    for p in prepped:
        in_specs.append(pl.BlockSpec(p.shape, lambda b, i: (0, 0)))

    out_specs = [
        pl.BlockSpec((bb, ti, C), lambda b, i: (b, i, 0)),
        pl.BlockSpec((bb, ti * N, C), lambda b, i: (b, i, 0)),
    ]
    out_shape = (jax.ShapeDtypeStruct((B, N, C), x.dtype),
                 jax.ShapeDtypeStruct((B, N * N, C), y.dtype))

    # Per-batch-block caches (x1, q, k, v) reused across the row-tile axis.
    scratch_shapes = [pltpu.VMEM((bb, N, C), jnp.float32) for _ in range(4)]

    est = _vmem_estimate(bb, ti, N, C, hid, param_bytes)
    vmem_limit = int(min(int(vmem_cap * 0.85), max(32 << 20, 2 * est)))

    node_out, edge_out = pl.pallas_call(
        encoder_block_kernel,
        grid=grid,
        in_specs=in_specs,
        out_specs=out_specs,
        out_shape=out_shape,
        scratch_shapes=scratch_shapes,
        compiler_params=pltpu.CompilerParams(
            dimension_semantics=("parallel", "arbitrary"),
            vmem_limit_bytes=vmem_limit),
    )(x, y_flat, *prepped)

    return node_out, edge_out.reshape(B, N, N, C)


def init_params(key, dim, mlp_ratio=4):
    """Deterministic synthetic parameters (same shapes/init style as nn.Linear)."""
    hid = dim * mlp_ratio
    keys = iter(jax.random.split(key, 24))

    def lin(fan_in, fan_out):
        bound = 1.0 / math.sqrt(fan_in)
        w = jax.random.uniform(next(keys), (fan_in, fan_out), jnp.float32, -bound, bound)
        b = jax.random.uniform(next(keys), (1, fan_out), jnp.float32, -bound, bound)
        return w, b

    ones = jnp.ones((1, dim), jnp.float32)
    zeros = jnp.zeros((1, dim), jnp.float32)

    qw, qb = lin(dim, dim)
    kw, kb = lin(dim, dim)
    vw, vb = lin(dim, dim)
    ew, eb = lin(dim, dim)
    oew, oeb = lin(dim, dim)
    onw, onb = lin(dim, dim)
    m1w1, m1b1 = lin(dim, hid)
    m1w2, m1b2 = lin(hid, dim)
    m2w1, m2b1 = lin(dim, hid)
    m2w2, m2b2 = lin(hid, dim)

    return [ones, zeros,                                   # ln1
            qw, qb, kw, kb, vw, vb, ew, eb, oew, oeb, onw, onb,
            ones, zeros, ones, zeros,                      # ln3, ln4
            m1w1, m1b1, m1w2, m1b2,
            m2w1, m2b1, m2w2, m2b2,
            ones, zeros, ones, zeros]                      # ln5, ln6


def reference(x, y, params, heads):
    """Pure-JAX replica of Encoder_Block.forward for validation."""
    (ln1_g, ln1_b, qw, qb, kw, kb, vw, vb, ew, eb, oew, oeb, onw, onb,
     ln3_g, ln3_b, ln4_g, ln4_b, m1w1, m1b1, m1w2, m1b2,
     m2w1, m2b1, m2w2, m2b2, ln5_g, ln5_b, ln6_g, ln6_b) = params
    d_k = x.shape[-1] // heads

    def ln(v, g, b):
        m = v.mean(-1, keepdims=True)
        var = ((v - m) ** 2).mean(-1, keepdims=True)
        return (v - m) / jnp.sqrt(var + LN_EPS) * g + b

    def lin(a, w, b):
        return a @ w + b

    x1 = ln(x, ln1_g, ln1_b)
    q = lin(x1, qw, qb)
    k = lin(x1, kw, kb)
    v = lin(x1, vw, vb)
    e = lin(y, ew, eb)
    attn = q[:, :, None, :] * k[:, None, :, :] / math.sqrt(d_k)
    attn = attn * (e + 1.0) * e
    edge_out = lin(attn, oew, oeb)
    attn_sm = jax.nn.softmax(attn, axis=2)
    node_out = lin((attn_sm * v[:, None, :, :]).sum(axis=2), onw, onb)

    x2 = ln(x1 + node_out, ln3_g, ln3_b)
    y2 = ln(y + edge_out, ln4_g, ln4_b)
    x_o = ln(x2 + lin(jax.nn.relu(lin(x2, m1w1, m1b1)), m1w2, m1b2), ln5_g, ln5_b)
    y_o = ln(y2 + lin(jax.nn.relu(lin(y2, m2w1, m2b1)), m2w2, m2b2), ln6_g, ln6_b)
    return x_o, y_o


def _check(node_out, edge_out, node_ref, edge_ref):
    assert node_out.shape == node_ref.shape and edge_out.shape == edge_ref.shape
    assert jnp.allclose(node_out, node_ref, atol=3e-2, rtol=3e-2), (
        float(jnp.max(jnp.abs(node_out - node_ref))))
    assert jnp.allclose(edge_out, edge_ref, atol=3e-2, rtol=3e-2), (
        float(jnp.max(jnp.abs(edge_out - edge_ref))))


if __name__ == "__main__":
    key = jax.random.PRNGKey(0)

    # --- primary test shape (matches the module's toy configuration) ---
    B, N, DIM, HEADS = 2, 8, 32, 4
    kx, ky, kp = jax.random.split(key, 3)
    x = jax.random.normal(kx, (B, N, DIM), jnp.float32)
    y = jax.random.normal(ky, (B, N, N, DIM), jnp.float32)
    params = init_params(kp, DIM, mlp_ratio=4)

    node_out, edge_out = encoder_block(x, y, params, HEADS)
    node_out = jax.block_until_ready(node_out)
    edge_out = jax.block_until_ready(edge_out)
    node_ref, edge_ref = reference(x, y, params, HEADS)
    _check(node_out, edge_out, node_ref, edge_ref)

    # --- exercise a multi-step grid on the batch axis ---
    node_out_b, edge_out_b = encoder_block(x, y, params, HEADS,
                                           batch_block=1, tile_i=N)
    jax.block_until_ready(edge_out_b)
    _check(node_out_b, edge_out_b, node_ref, edge_ref)

    # --- exercise query-row tiling (scratch reuse across row tiles) ---
    N2 = 16
    kx2, ky2 = jax.random.split(kx)
    x2 = jax.random.normal(kx2, (B, N2, DIM), jnp.float32)
    y2 = jax.random.normal(ky2, (B, N2, N2, DIM), jnp.float32)
    node_ref2, edge_ref2 = reference(x2, y2, params, HEADS)

    node_out2, edge_out2 = encoder_block(x2, y2, params, HEADS,
                                         batch_block=2, tile_i=8)
    jax.block_until_ready(edge_out2)
    _check(node_out2, edge_out2, node_ref2, edge_ref2)

    # --- both axes multi-step: scratch recomputed per batch block ---
    node_out3, edge_out3 = encoder_block(x2, y2, params, HEADS,
                                         batch_block=1, tile_i=8)
    jax.block_until_ready(edge_out3)
    _check(node_out3, edge_out3, node_ref2, edge_ref2)

    print("KERNEL_OK")
</pallas_src>

<mosaic_0001>
module attributes {stable_mosaic.version = 11 : i64} {
  func.func @encoder_block_kernel(%arg0: i32, %arg1: i32, %arg2: memref<1x8x32xf32, #tpu.memory_space<vmem>>, %arg3: memref<1x64x32xf32, #tpu.memory_space<vmem>>, %arg4: memref<1x32xf32, #tpu.memory_space<vmem>>, %arg5: memref<1x32xf32, #tpu.memory_space<vmem>>, %arg6: memref<32x96xf32, #tpu.memory_space<vmem>>, %arg7: memref<1x96xf32, #tpu.memory_space<vmem>>, %arg8: memref<32x32xf32, #tpu.memory_space<vmem>>, %arg9: memref<1x32xf32, #tpu.memory_space<vmem>>, %arg10: memref<32x32xf32, #tpu.memory_space<vmem>>, %arg11: memref<1x32xf32, #tpu.memory_space<vmem>>, %arg12: memref<32x32xf32, #tpu.memory_space<vmem>>, %arg13: memref<1x32xf32, #tpu.memory_space<vmem>>, %arg14: memref<1x32xf32, #tpu.memory_space<vmem>>, %arg15: memref<1x32xf32, #tpu.memory_space<vmem>>, %arg16: memref<1x32xf32, #tpu.memory_space<vmem>>, %arg17: memref<1x32xf32, #tpu.memory_space<vmem>>, %arg18: memref<32x128xf32, #tpu.memory_space<vmem>>, %arg19: memref<1x128xf32, #tpu.memory_space<vmem>>, %arg20: memref<128x32xf32, #tpu.memory_space<vmem>>, %arg21: memref<1x32xf32, #tpu.memory_space<vmem>>, %arg22: memref<32x128xf32, #tpu.memory_space<vmem>>, %arg23: memref<1x128xf32, #tpu.memory_space<vmem>>, %arg24: memref<128x32xf32, #tpu.memory_space<vmem>>, %arg25: memref<1x32xf32, #tpu.memory_space<vmem>>, %arg26: memref<1x32xf32, #tpu.memory_space<vmem>>, %arg27: memref<1x32xf32, #tpu.memory_space<vmem>>, %arg28: memref<1x32xf32, #tpu.memory_space<vmem>>, %arg29: memref<1x32xf32, #tpu.memory_space<vmem>>, %arg30: memref<1x8x32xf32, #tpu.memory_space<vmem>>, %arg31: memref<1x64x32xf32, #tpu.memory_space<vmem>>, %arg32: memref<1x8x32xf32, #tpu.memory_space<vmem>>, %arg33: memref<1x8x32xf32, #tpu.memory_space<vmem>>, %arg34: memref<1x8x32xf32, #tpu.memory_space<vmem>>, %arg35: memref<1x8x32xf32, #tpu.memory_space<vmem>>) attributes {dimension_semantics = [#tpu.dimension_semantics<parallel>, #tpu.dimension_semantics<arbitrary>], iteration_bounds = array<i64: 2, 1>, scalar_prefetch = 0 : i64, scratch_operands = 4 : i64, tpu.core_type = #tpu.core_type<tc>, window_params = [{transform_indices = @transform_0, window_bounds = array<i64: 1, 8, 32>}, {transform_indices = @transform_1, window_bounds = array<i64: 1, 64, 32>}, {pipeline_mode = #tpu.pipeline_mode<synchronous>, transform_indices = @transform_2, window_bounds = array<i64: 1, 32>}, {pipeline_mode = #tpu.pipeline_mode<synchronous>, transform_indices = @transform_3, window_bounds = array<i64: 1, 32>}, {pipeline_mode = #tpu.pipeline_mode<synchronous>, transform_indices = @transform_4, window_bounds = array<i64: 32, 96>}, {pipeline_mode = #tpu.pipeline_mode<synchronous>, transform_indices = @transform_5, window_bounds = array<i64: 1, 96>}, {pipeline_mode = #tpu.pipeline_mode<synchronous>, transform_indices = @transform_6, window_bounds = array<i64: 32, 32>}, {pipeline_mode = #tpu.pipeline_mode<synchronous>, transform_indices = @transform_7, window_bounds = array<i64: 1, 32>}, {pipeline_mode = #tpu.pipeline_mode<synchronous>, transform_indices = @transform_8, window_bounds = array<i64: 32, 32>}, {pipeline_mode = #tpu.pipeline_mode<synchronous>, transform_indices = @transform_9, window_bounds = array<i64: 1, 32>}, {pipeline_mode = #tpu.pipeline_mode<synchronous>, transform_indices = @transform_10, window_bounds = array<i64: 32, 32>}, {pipeline_mode = #tpu.pipeline_mode<synchronous>, transform_indices = @transform_11, window_bounds = array<i64: 1, 32>}, {pipeline_mode = #tpu.pipeline_mode<synchronous>, transform_indices = @transform_12, window_bounds = array<i64: 1, 32>}, {pipeline_mode = #tpu.pipeline_mode<synchronous>, transform_indices = @transform_13, window_bounds = array<i64: 1, 32>}, {pipeline_mode = #tpu.pipeline_mode<synchronous>, transform_indices = @transform_14, window_bounds = array<i64: 1, 32>}, {pipeline_mode = #tpu.pipeline_mode<synchronous>, transform_indices = @transform_15, window_bounds = array<i64: 1, 32>}, {pipeline_mode = #tpu.pipeline_mode<synchronous>, transform_indices = @transform_16, window_bounds = array<i64: 32, 128>}, {pipeline_mode = #tpu.pipeline_mode<synchronous>, transform_indices = @transform_17, window_bounds = array<i64: 1, 128>}, {pipeline_mode = #tpu.pipeline_mode<synchronous>, transform_indices = @transform_18, window_bounds = array<i64: 128, 32>}, {pipeline_mode = #tpu.pipeline_mode<synchronous>, transform_indices = @transform_19, window_bounds = array<i64: 1, 32>}, {pipeline_mode = #tpu.pipeline_mode<synchronous>, transform_indices = @transform_20, window_bounds = array<i64: 32, 128>}, {pipeline_mode = #tpu.pipeline_mode<synchronous>, transform_indices = @transform_21, window_bounds = array<i64: 1, 128>}, {pipeline_mode = #tpu.pipeline_mode<synchronous>, transform_indices = @transform_22, window_bounds = array<i64: 128, 32>}, {pipeline_mode = #tpu.pipeline_mode<synchronous>, transform_indices = @transform_23, window_bounds = array<i64: 1, 32>}, {pipeline_mode = #tpu.pipeline_mode<synchronous>, transform_indices = @transform_24, window_bounds = array<i64: 1, 32>}, {pipeline_mode = #tpu.pipeline_mode<synchronous>, transform_indices = @transform_25, window_bounds = array<i64: 1, 32>}, {pipeline_mode = #tpu.pipeline_mode<synchronous>, transform_indices = @transform_26, window_bounds = array<i64: 1, 32>}, {pipeline_mode = #tpu.pipeline_mode<synchronous>, transform_indices = @transform_27, window_bounds = array<i64: 1, 32>}, {transform_indices = @transform_28, window_bounds = array<i64: 1, 8, 32>}, {transform_indices = @transform_29, window_bounds = array<i64: 1, 64, 32>}]} {
    %c0_i32 = arith.constant 0 : i32
    %0 = arith.cmpi eq, %arg1, %c0_i32 : i32
    %1 = arith.extui %0 : i1 to i32
    %c0_i32_0 = arith.constant 0 : i32
    %2 = arith.cmpi ne, %1, %c0_i32_0 : i32
    scf.if %2 {
      %c0_99 = arith.constant 0 : index
      %c0_100 = arith.constant 0 : index
      %c0_101 = arith.constant 0 : index
      %191 = vector.load %arg2[%c0_99, %c0_100, %c0_101] : memref<1x8x32xf32, #tpu.memory_space<vmem>>, vector<1x8x32xf32>
      %192 = vector.shape_cast %191 : vector<1x8x32xf32> to vector<8x32xf32>
      %c0_102 = arith.constant 0 : index
      %c0_103 = arith.constant 0 : index
      %193 = vector.load %arg4[%c0_102, %c0_103] : memref<1x32xf32, #tpu.memory_space<vmem>>, vector<1x32xf32>
      %c0_104 = arith.constant 0 : index
      %c0_105 = arith.constant 0 : index
      %194 = vector.load %arg5[%c0_104, %c0_105] : memref<1x32xf32, #tpu.memory_space<vmem>>, vector<1x32xf32>
      %cst_106 = arith.constant dense<0.000000e+00> : vector<8xf32>
      %195 = vector.multi_reduction <add>, %192, %cst_106 [1] : vector<8x32xf32> to vector<8xf32>
      %196 = vector.shape_cast %195 : vector<8xf32> to vector<8x1xf32>
      %cst_107 = arith.constant 3.200000e+01 : f32
      %197 = vector.broadcast %cst_107 : f32 to vector<8x1xf32>
      %198 = arith.divf %196, %197 : vector<8x1xf32>
      %199 = arith.mulf %192, %192 : vector<8x32xf32>
      %cst_108 = arith.constant dense<0.000000e+00> : vector<8xf32>
      %200 = vector.multi_reduction <add>, %199, %cst_108 [1] : vector<8x32xf32> to vector<8xf32>
      %201 = vector.shape_cast %200 : vector<8xf32> to vector<8x1xf32>
      %cst_109 = arith.constant 3.200000e+01 : f32
      %202 = vector.broadcast %cst_109 : f32 to vector<8x1xf32>
      %203 = arith.divf %201, %202 : vector<8x1xf32>
      %204 = arith.mulf %198, %198 : vector<8x1xf32>
      %205 = arith.subf %203, %204 : vector<8x1xf32>
      %cst_110 = arith.constant 0.000000e+00 : f32
      %206 = vector.broadcast %cst_110 : f32 to vector<8x1xf32>
      %207 = arith.maximumf %205, %206 : vector<8x1xf32>
      %208 = vector.broadcast %198 : vector<8x1xf32> to vector<8x32xf32>
      %209 = arith.subf %192, %208 : vector<8x32xf32>
      %cst_111 = arith.constant 9.99999974E-6 : f32
      %210 = vector.broadcast %cst_111 : f32 to vector<8x1xf32>
      %211 = arith.addf %207, %210 : vector<8x1xf32>
      %212 = math.rsqrt %211 : vector<8x1xf32>
      %213 = vector.broadcast %212 : vector<8x1xf32> to vector<8x32xf32>
      %214 = arith.mulf %209, %213 : vector<8x32xf32>
      %215 = vector.broadcast %193 : vector<1x32xf32> to vector<8x32xf32>
      %216 = arith.mulf %214, %215 : vector<8x32xf32>
      %217 = vector.broadcast %194 : vector<1x32xf32> to vector<8x32xf32>
      %218 = arith.addf %216, %217 : vector<8x32xf32>
      %c0_112 = arith.constant 0 : index
      %c0_113 = arith.constant 0 : index
      %219 = vector.load %arg6[%c0_112, %c0_113] : memref<32x96xf32, #tpu.memory_space<vmem>>, vector<32x96xf32>
      %cst_114 = arith.constant dense<0.000000e+00> : vector<8x96xf32>
      %220 = tpu.matmul %218, %219, %cst_114 {dimension_numbers = #tpu.dot_dimension_numbers<[1], [0], [0], [1], [0, 0, 1, 1], [], []>} : vector<8x32xf32>, vector<32x96xf32>, vector<8x96xf32> -> vector<8x96xf32>
      %c0_115 = arith.constant 0 : index
      %c0_116 = arith.constant 0 : index
      %221 = vector.load %arg7[%c0_115, %c0_116] : memref<1x96xf32, #tpu.memory_space<vmem>>, vector<1x96xf32>
      %222 = vector.broadcast %221 : vector<1x96xf32> to vector<8x96xf32>
      %223 = arith.addf %220, %222 : vector<8x96xf32>
      %224 = vector.shape_cast %218 : vector<8x32xf32> to vector<1x8x32xf32>
      %c0_117 = arith.constant 0 : index
      %c0_118 = arith.constant 0 : index
      %c0_119 = arith.constant 0 : index
      %225 = vector.load %arg32[%c0_117, %c0_118, %c0_119] : memref<1x8x32xf32, #tpu.memory_space<vmem>>, vector<1x8x32xf32>
      tpu.vector_store %arg32[%c0_117, %c0_118, %c0_119], %224 {strides = array<i32>} : memref<1x8x32xf32, #tpu.memory_space<vmem>>, vector<1x8x32xf32>,
      %226 = vector.extract_strided_slice %223 {offsets = [0, 0], sizes = [8, 32], strides = [1, 1]} : vector<8x96xf32> to vector<8x32xf32>
      %227 = vector.shape_cast %226 : vector<8x32xf32> to vector<1x8x32xf32>
      %c0_120 = arith.constant 0 : index
      %c0_121 = arith.constant 0 : index
      %c0_122 = arith.constant 0 : index
      %228 = vector.load %arg33[%c0_120, %c0_121, %c0_122] : memref<1x8x32xf32, #tpu.memory_space<vmem>>, vector<1x8x32xf32>
      tpu.vector_store %arg33[%c0_120, %c0_121, %c0_122], %227 {strides = array<i32>} : memref<1x8x32xf32, #tpu.memory_space<vmem>>, vector<1x8x32xf32>,
      %229 = vector.extract_strided_slice %223 {offsets = [0, 32], sizes = [8, 32], strides = [1, 1]} : vector<8x96xf32> to vector<8x32xf32>
      %230 = vector.shape_cast %229 : vector<8x32xf32> to vector<1x8x32xf32>
      %c0_123 = arith.constant 0 : index
      %c0_124 = arith.constant 0 : index
      %c0_125 = arith.constant 0 : index
      %231 = vector.load %arg34[%c0_123, %c0_124, %c0_125] : memref<1x8x32xf32, #tpu.memory_space<vmem>>, vector<1x8x32xf32>
      tpu.vector_store %arg34[%c0_123, %c0_124, %c0_125], %230 {strides = array<i32>} : memref<1x8x32xf32, #tpu.memory_space<vmem>>, vector<1x8x32xf32>,
      %232 = vector.extract_strided_slice %223 {offsets = [0, 64], sizes = [8, 32], strides = [1, 1]} : vector<8x96xf32> to vector<8x32xf32>
      %233 = vector.shape_cast %232 : vector<8x32xf32> to vector<1x8x32xf32>
      %c0_126 = arith.constant 0 : index
      %c0_127 = arith.constant 0 : index
      %c0_128 = arith.constant 0 : index
      %234 = vector.load %arg35[%c0_126, %c0_127, %c0_128] : memref<1x8x32xf32, #tpu.memory_space<vmem>>, vector<1x8x32xf32>
      tpu.vector_store %arg35[%c0_126, %c0_127, %c0_128], %233 {strides = array<i32>} : memref<1x8x32xf32, #tpu.memory_space<vmem>>, vector<1x8x32xf32>,
    } else {
    }
    %c8_i32 = arith.constant 8 : i32
    %3 = arith.muli %arg1, %c8_i32 : i32
    %4 = tpu.assume_multiple %3, 8 : i32
    %c0 = arith.constant 0 : index
    %5 = arith.index_cast %4 : i32 to index
    %c0_1 = arith.constant 0 : index
    %6 = vector.load %arg32[%c0, %5, %c0_1] : memref<1x8x32xf32, #tpu.memory_space<vmem>>, vector<1x8x32xf32>
    %7 = vector.shape_cast %6 : vector<1x8x32xf32> to vector<8x32xf32>
    %c0_2 = arith.constant 0 : index
    %8 = arith.index_cast %4 : i32 to index
    %c0_3 = arith.constant 0 : index
    %9 = vector.load %arg33[%c0_2, %8, %c0_3] : memref<1x8x32xf32, #tpu.memory_space<vmem>>, vector<1x8x32xf32>
    %10 = vector.shape_cast %9 : vector<1x8x32xf32> to vector<1x8x1x32xf32>
    %c0_4 = arith.constant 0 : index
    %c0_5 = arith.constant 0 : index
    %c0_6 = arith.constant 0 : index
    %11 = vector.load %arg34[%c0_4, %c0_5, %c0_6] : memref<1x8x32xf32, #tpu.memory_space<vmem>>, vector<1x8x32xf32>
    %12 = vector.shape_cast %11 : vector<1x8x32xf32> to vector<1x1x8x32xf32>
    %c0_7 = arith.constant 0 : index
    %c0_8 = arith.constant 0 : index
    %c0_9 = arith.constant 0 : index
    %13 = vector.load %arg35[%c0_7, %c0_8, %c0_9] : memref<1x8x32xf32, #tpu.memory_space<vmem>>, vector<1x8x32xf32>
    %14 = vector.shape_cast %13 : vector<1x8x32xf32> to vector<1x1x8x32xf32>
    %c0_10 = arith.constant 0 : index
    %c0_11 = arith.constant 0 : index
    %c0_12 = arith.constant 0 : index
    %15 = vector.load %arg3[%c0_10, %c0_11, %c0_12] : memref<1x64x32xf32, #tpu.memory_space<vmem>>, vector<1x64x32xf32>
    %16 = vector.shape_cast %15 : vector<1x64x32xf32> to vector<64x32xf32>
    %c0_13 = arith.constant 0 : index
    %c0_14 = arith.constant 0 : index
    %17 = vector.load %arg8[%c0_13, %c0_14] : memref<32x32xf32, #tpu.memory_space<vmem>>, vector<32x32xf32>
    %cst = arith.constant dense<0.000000e+00> : vector<64x32xf32>
    %18 = tpu.matmul %16, %17, %cst {dimension_numbers = #tpu.dot_dimension_numbers<[1], [0], [0], [1], [0, 0, 1, 1], [], []>} : vector<64x32xf32>, vector<32x32xf32>, vector<64x32xf32> -> vector<64x32xf32>
    %c0_15 = arith.constant 0 : index
    %c0_16 = arith.constant 0 : index
    %19 = vector.load %arg9[%c0_15, %c0_16] : memref<1x32xf32, #tpu.memory_space<vmem>>, vector<1x32xf32>
    %20 = vector.broadcast %19 : vector<1x32xf32> to vector<64x32xf32>
    %21 = arith.addf %18, %20 : vector<64x32xf32>
    %22 = vector.shape_cast %21 : vector<64x32xf32> to vector<1x8x8x32xf32>
    %23 = vector.broadcast %10 : vector<1x8x1x32xf32> to vector<1x8x8x32xf32>
    %24 = vector.broadcast %12 : vector<1x1x8x32xf32> to vector<1x8x8x32xf32>
    %25 = arith.mulf %23, %24 : vector<1x8x8x32xf32>
    %cst_17 = arith.constant 1.000000e+00 : f32
    %26 = vector.broadcast %cst_17 : f32 to vector<1x8x8x32xf32>
    %27 = arith.addf %22, %26 : vector<1x8x8x32xf32>
    %28 = arith.mulf %25, %27 : vector<1x8x8x32xf32>
    %29 = arith.mulf %28, %22 : vector<1x8x8x32xf32>
    %30 = vector.shape_cast %29 : vector<1x8x8x32xf32> to vector<64x32xf32>
    %c0_18 = arith.constant 0 : index
    %c0_19 = arith.constant 0 : index
    %31 = vector.load %arg10[%c0_18, %c0_19] : memref<32x32xf32, #tpu.memory_space<vmem>>, vector<32x32xf32>
    %cst_20 = arith.constant dense<0.000000e+00> : vector<64x32xf32>
    %32 = tpu.matmul %30, %31, %cst_20 {dimension_numbers = #tpu.dot_dimension_numbers<[1], [0], [0], [1], [0, 0, 1, 1], [], []>} : vector<64x32xf32>, vector<32x32xf32>, vector<64x32xf32> -> vector<64x32xf32>
    %c0_21 = arith.constant 0 : index
    %c0_22 = arith.constant 0 : index
    %33 = vector.load %arg11[%c0_21, %c0_22] : memref<1x32xf32, #tpu.memory_space<vmem>>, vector<1x32xf32>
    %34 = vector.broadcast %33 : vector<1x32xf32> to vector<64x32xf32>
    %35 = arith.addf %32, %34 : vector<64x32xf32>
    %cst_23 = arith.constant dense<0xFF800000> : vector<1x8x32xf32>
    %36 = vector.multi_reduction <maximumf>, %29, %cst_23 [2] : vector<1x8x8x32xf32> to vector<1x8x32xf32>
    %37 = vector.shape_cast %36 : vector<1x8x32xf32> to vector<1x8x1x32xf32>
    %38 = vector.broadcast %37 : vector<1x8x1x32xf32> to vector<1x8x8x32xf32>
    %39 = arith.subf %29, %38 : vector<1x8x8x32xf32>
    %40 = math.exp %39 : vector<1x8x8x32xf32>
    %cst_24 = arith.constant dense<0.000000e+00> : vector<1x8x32xf32>
    %41 = vector.multi_reduction <add>, %40, %cst_24 [2] : vector<1x8x8x32xf32> to vector<1x8x32xf32>
    %42 = vector.shape_cast %41 : vector<1x8x32xf32> to vector<1x8x1x32xf32>
    %43 = tpu.reciprocal %42 {approx = true} : vector<1x8x1x32xf32> -> vector<1x8x1x32xf32>
    %44 = vector.broadcast %43 : vector<1x8x1x32xf32> to vector<1x8x8x32xf32>
    %45 = arith.mulf %40, %44 : vector<1x8x8x32xf32>
    %46 = vector.broadcast %14 : vector<1x1x8x32xf32> to vector<1x8x8x32xf32>
    %47 = arith.mulf %45, %46 : vector<1x8x8x32xf32>
    %cst_25 = arith.constant dense<0.000000e+00> : vector<1x8x32xf32>
    %48 = vector.multi_reduction <add>, %47, %cst_25 [2] : vector<1x8x8x32xf32> to vector<1x8x32xf32>
    %49 = vector.shape_cast %48 : vector<1x8x32xf32> to vector<8x32xf32>
    %c0_26 = arith.constant 0 : index
    %c0_27 = arith.constant 0 : index
    %50 = vector.load %arg12[%c0_26, %c0_27] : memref<32x32xf32, #tpu.memory_space<vmem>>, vector<32x32xf32>
    %cst_28 = arith.constant dense<0.000000e+00> : vector<8x32xf32>
    %51 = tpu.matmul %49, %50, %cst_28 {dimension_numbers = #tpu.dot_dimension_numbers<[1], [0], [0], [1], [0, 0, 1, 1], [], []>} : vector<8x32xf32>, vector<32x32xf32>, vector<8x32xf32> -> vector<8x32xf32>
    %c0_29 = arith.constant 0 : index
    %c0_30 = arith.constant 0 : index
    %52 = vector.load %arg13[%c0_29, %c0_30] : memref<1x32xf32, #tpu.memory_space<vmem>>, vector<1x32xf32>
    %53 = vector.broadcast %52 : vector<1x32xf32> to vector<8x32xf32>
    %54 = arith.addf %51, %53 : vector<8x32xf32>
    %55 = arith.addf %7, %54 : vector<8x32xf32>
    %c0_31 = arith.constant 0 : index
    %c0_32 = arith.constant 0 : index
    %56 = vector.load %arg14[%c0_31, %c0_32] : memref<1x32xf32, #tpu.memory_space<vmem>>, vector<1x32xf32>
    %c0_33 = arith.constant 0 : index
    %c0_34 = arith.constant 0 : index
    %57 = vector.load %arg15[%c0_33, %c0_34] : memref<1x32xf32, #tpu.memory_space<vmem>>, vector<1x32xf32>
    %cst_35 = arith.constant dense<0.000000e+00> : vector<8xf32>
    %58 = vector.multi_reduction <add>, %55, %cst_35 [1] : vector<8x32xf32> to vector<8xf32>
    %59 = vector.shape_cast %58 : vector<8xf32> to vector<8x1xf32>
    %cst_36 = arith.constant 3.200000e+01 : f32
    %60 = vector.broadcast %cst_36 : f32 to vector<8x1xf32>
    %61 = arith.divf %59, %60 : vector<8x1xf32>
    %62 = arith.mulf %55, %55 : vector<8x32xf32>
    %cst_37 = arith.constant dense<0.000000e+00> : vector<8xf32>
    %63 = vector.multi_reduction <add>, %62, %cst_37 [1] : vector<8x32xf32> to vector<8xf32>
    %64 = vector.shape_cast %63 : vector<8xf32> to vector<8x1xf32>
    %cst_38 = arith.constant 3.200000e+01 : f32
    %65 = vector.broadcast %cst_38 : f32 to vector<8x1xf32>
    %66 = arith.divf %64, %65 : vector<8x1xf32>
    %67 = arith.mulf %61, %61 : vector<8x1xf32>
    %68 = arith.subf %66, %67 : vector<8x1xf32>
    %cst_39 = arith.constant 0.000000e+00 : f32
    %69 = vector.broadcast %cst_39 : f32 to vector<8x1xf32>
    %70 = arith.maximumf %68, %69 : vector<8x1xf32>
    %71 = vector.broadcast %61 : vector<8x1xf32> to vector<8x32xf32>
    %72 = arith.subf %55, %71 : vector<8x32xf32>
    %cst_40 = arith.constant 9.99999974E-6 : f32
    %73 = vector.broadcast %cst_40 : f32 to vector<8x1xf32>
    %74 = arith.addf %70, %73 : vector<8x1xf32>
    %75 = math.rsqrt %74 : vector<8x1xf32>
    %76 = vector.broadcast %75 : vector<8x1xf32> to vector<8x32xf32>
    %77 = arith.mulf %72, %76 : vector<8x32xf32>
    %78 = vector.broadcast %56 : vector<1x32xf32> to vector<8x32xf32>
    %79 = arith.mulf %77, %78 : vector<8x32xf32>
    %80 = vector.broadcast %57 : vector<1x32xf32> to vector<8x32xf32>
    %81 = arith.addf %79, %80 : vector<8x32xf32>
    %82 = arith.addf %16, %35 : vector<64x32xf32>
    %c0_41 = arith.constant 0 : index
    %c0_42 = arith.constant 0 : index
    %83 = vector.load %arg16[%c0_41, %c0_42] : memref<1x32xf32, #tpu.memory_space<vmem>>, vector<1x32xf32>
    %c0_43 = arith.constant 0 : index
    %c0_44 = arith.constant 0 : index
    %84 = vector.load %arg17[%c0_43, %c0_44] : memref<1x32xf32, #tpu.memory_space<vmem>>, vector<1x32xf32>
    %cst_45 = arith.constant dense<0.000000e+00> : vector<64xf32>
    %85 = vector.multi_reduction <add>, %82, %cst_45 [1] : vector<64x32xf32> to vector<64xf32>
    %86 = vector.shape_cast %85 : vector<64xf32> to vector<64x1xf32>
    %cst_46 = arith.constant 3.200000e+01 : f32
    %87 = vector.broadcast %cst_46 : f32 to vector<64x1xf32>
    %88 = arith.divf %86, %87 : vector<64x1xf32>
    %89 = arith.mulf %82, %82 : vector<64x32xf32>
    %cst_47 = arith.constant dense<0.000000e+00> : vector<64xf32>
    %90 = vector.multi_reduction <add>, %89, %cst_47 [1] : vector<64x32xf32> to vector<64xf32>
    %91 = vector.shape_cast %90 : vector<64xf32> to vector<64x1xf32>
    %cst_48 = arith.constant 3.200000e+01 : f32
    %92 = vector.broadcast %cst_48 : f32 to vector<64x1xf32>
    %93 = arith.divf %91, %92 : vector<64x1xf32>
    %94 = arith.mulf %88, %88 : vector<64x1xf32>
    %95 = arith.subf %93, %94 : vector<64x1xf32>
    %cst_49 = arith.constant 0.000000e+00 : f32
    %96 = vector.broadcast %cst_49 : f32 to vector<64x1xf32>
    %97 = arith.maximumf %95, %96 : vector<64x1xf32>
    %98 = vector.broadcast %88 : vector<64x1xf32> to vector<64x32xf32>
    %99 = arith.subf %82, %98 : vector<64x32xf32>
    %cst_50 = arith.constant 9.99999974E-6 : f32
    %100 = vector.broadcast %cst_50 : f32 to vector<64x1xf32>
    %101 = arith.addf %97, %100 : vector<64x1xf32>
    %102 = math.rsqrt %101 : vector<64x1xf32>
    %103 = vector.broadcast %102 : vector<64x1xf32> to vector<64x32xf32>
    %104 = arith.mulf %99, %103 : vector<64x32xf32>
    %105 = vector.broadcast %83 : vector<1x32xf32> to vector<64x32xf32>
    %106 = arith.mulf %104, %105 : vector<64x32xf32>
    %107 = vector.broadcast %84 : vector<1x32xf32> to vector<64x32xf32>
    %108 = arith.addf %106, %107 : vector<64x32xf32>
    %c0_51 = arith.constant 0 : index
    %c0_52 = arith.constant 0 : index
    %109 = vector.load %arg18[%c0_51, %c0_52] : memref<32x128xf32, #tpu.memory_space<vmem>>, vector<32x128xf32>
    %cst_53 = arith.constant dense<0.000000e+00> : vector<8x128xf32>
    %110 = tpu.matmul %81, %109, %cst_53 {dimension_numbers = #tpu.dot_dimension_numbers<[1], [0], [0], [1], [0, 0, 1, 1], [], []>} : vector<8x32xf32>, vector<32x128xf32>, vector<8x128xf32> -> vector<8x128xf32>
    %c0_54 = arith.constant 0 : index
    %c0_55 = arith.constant 0 : index
    %111 = vector.load %arg19[%c0_54, %c0_55] : memref<1x128xf32, #tpu.memory_space<vmem>>, vector<1x128xf32>
    %112 = vector.broadcast %111 : vector<1x128xf32> to vector<8x128xf32>
    %113 = arith.addf %110, %112 : vector<8x128xf32>
    %cst_56 = arith.constant 0.000000e+00 : f32
    %114 = vector.broadcast %cst_56 : f32 to vector<8x128xf32>
    %115 = arith.maximumf %113, %114 : vector<8x128xf32>
    %c0_57 = arith.constant 0 : index
    %c0_58 = arith.constant 0 : index
    %116 = vector.load %arg20[%c0_57, %c0_58] : memref<128x32xf32, #tpu.memory_space<vmem>>, vector<128x32xf32>
    %cst_59 = arith.constant dense<0.000000e+00> : vector<8x32xf32>
    %117 = tpu.matmul %115, %116, %cst_59 {dimension_numbers = #tpu.dot_dimension_numbers<[1], [0], [0], [1], [0, 0, 1, 1], [], []>} : vector<8x128xf32>, vector<128x32xf32>, vector<8x32xf32> -> vector<8x32xf32>
    %c0_60 = arith.constant 0 : index
    %c0_61 = arith.constant 0 : index
    %118 = vector.load %arg21[%c0_60, %c0_61] : memref<1x32xf32, #tpu.memory_space<vmem>>, vector<1x32xf32>
    %119 = vector.broadcast %118 : vector<1x32xf32> to vector<8x32xf32>
    %120 = arith.addf %117, %119 : vector<8x32xf32>
    %121 = arith.addf %81, %120 : vector<8x32xf32>
    %c0_62 = arith.constant 0 : index
    %c0_63 = arith.constant 0 : index
    %122 = vector.load %arg26[%c0_62, %c0_63] : memref<1x32xf32, #tpu.memory_space<vmem>>, vector<1x32xf32>
    %c0_64 = arith.constant 0 : index
    %c0_65 = arith.constant 0 : index
    %123 = vector.load %arg27[%c0_64, %c0_65] : memref<1x32xf32, #tpu.memory_space<vmem>>, vector<1x32xf32>
    %cst_66 = arith.constant dense<0.000000e+00> : vector<8xf32>
    %124 = vector.multi_reduction <add>, %121, %cst_66 [1] : vector<8x32xf32> to vector<8xf32>
    %125 = vector.shape_cast %124 : vector<8xf32> to vector<8x1xf32>
    %cst_67 = arith.constant 3.200000e+01 : f32
    %126 = vector.broadcast %cst_67 : f32 to vector<8x1xf32>
    %127 = arith.divf %125, %126 : vector<8x1xf32>
    %128 = arith.mulf %121, %121 : vector<8x32xf32>
    %cst_68 = arith.constant dense<0.000000e+00> : vector<8xf32>
    %129 = vector.multi_reduction <add>, %128, %cst_68 [1] : vector<8x32xf32> to vector<8xf32>
    %130 = vector.shape_cast %129 : vector<8xf32> to vector<8x1xf32>
    %cst_69 = arith.constant 3.200000e+01 : f32
    %131 = vector.broadcast %cst_69 : f32 to vector<8x1xf32>
    %132 = arith.divf %130, %131 : vector<8x1xf32>
    %133 = arith.mulf %127, %127 : vector<8x1xf32>
    %134 = arith.subf %132, %133 : vector<8x1xf32>
    %cst_70 = arith.constant 0.000000e+00 : f32
    %135 = vector.broadcast %cst_70 : f32 to vector<8x1xf32>
    %136 = arith.maximumf %134, %135 : vector<8x1xf32>
    %137 = vector.broadcast %127 : vector<8x1xf32> to vector<8x32xf32>
    %138 = arith.subf %121, %137 : vector<8x32xf32>
    %cst_71 = arith.constant 9.99999974E-6 : f32
    %139 = vector.broadcast %cst_71 : f32 to vector<8x1xf32>
    %140 = arith.addf %136, %139 : vector<8x1xf32>
    %141 = math.rsqrt %140 : vector<8x1xf32>
    %142 = vector.broadcast %141 : vector<8x1xf32> to vector<8x32xf32>
    %143 = arith.mulf %138, %142 : vector<8x32xf32>
    %144 = vector.broadcast %122 : vector<1x32xf32> to vector<8x32xf32>
    %145 = arith.mulf %143, %144 : vector<8x32xf32>
    %146 = vector.broadcast %123 : vector<1x32xf32> to vector<8x32xf32>
    %147 = arith.addf %145, %146 : vector<8x32xf32>
    %c0_72 = arith.constant 0 : index
    %c0_73 = arith.constant 0 : index
    %148 = vector.load %arg22[%c0_72, %c0_73] : memref<32x128xf32, #tpu.memory_space<vmem>>, vector<32x128xf32>
    %cst_74 = arith.constant dense<0.000000e+00> : vector<64x128xf32>
    %149 = tpu.matmul %108, %148, %cst_74 {dimension_numbers = #tpu.dot_dimension_numbers<[1], [0], [0], [1], [0, 0, 1, 1], [], []>} : vector<64x32xf32>, vector<32x128xf32>, vector<64x128xf32> -> vector<64x128xf32>
    %c0_75 = arith.constant 0 : index
    %c0_76 = arith.constant 0 : index
    %150 = vector.load %arg23[%c0_75, %c0_76] : memref<1x128xf32, #tpu.memory_space<vmem>>, vector<1x128xf32>
    %151 = vector.broadcast %150 : vector<1x128xf32> to vector<64x128xf32>
    %152 = arith.addf %149, %151 : vector<64x128xf32>
    %cst_77 = arith.constant 0.000000e+00 : f32
    %153 = vector.broadcast %cst_77 : f32 to vector<64x128xf32>
    %154 = arith.maximumf %152, %153 : vector<64x128xf32>
    %c0_78 = arith.constant 0 : index
    %c0_79 = arith.constant 0 : index
    %155 = vector.load %arg24[%c0_78, %c0_79] : memref<128x32xf32, #tpu.memory_space<vmem>>, vector<128x32xf32>
    %cst_80 = arith.constant dense<0.000000e+00> : vector<64x32xf32>
    %156 = tpu.matmul %154, %155, %cst_80 {dimension_numbers = #tpu.dot_dimension_numbers<[1], [0], [0], [1], [0, 0, 1, 1], [], []>} : vector<64x128xf32>, vector<128x32xf32>, vector<64x32xf32> -> vector<64x32xf32>
    %c0_81 = arith.constant 0 : index
    %c0_82 = arith.constant 0 : index
    %157 = vector.load %arg25[%c0_81, %c0_82] : memref<1x32xf32, #tpu.memory_space<vmem>>, vector<1x32xf32>
    %158 = vector.broadcast %157 : vector<1x32xf32> to vector<64x32xf32>
    %159 = arith.addf %156, %158 : vector<64x32xf32>
    %160 = arith.addf %108, %159 : vector<64x32xf32>
    %c0_83 = arith.constant 0 : index
    %c0_84 = arith.constant 0 : index
    %161 = vector.load %arg28[%c0_83, %c0_84] : memref<1x32xf32, #tpu.memory_space<vmem>>, vector<1x32xf32>
    %c0_85 = arith.constant 0 : index
    %c0_86 = arith.constant 0 : index
    %162 = vector.load %arg29[%c0_85, %c0_86] : memref<1x32xf32, #tpu.memory_space<vmem>>, vector<1x32xf32>
    %cst_87 = arith.constant dense<0.000000e+00> : vector<64xf32>
    %163 = vector.multi_reduction <add>, %160, %cst_87 [1] : vector<64x32xf32> to vector<64xf32>
    %164 = vector.shape_cast %163 : vector<64xf32> to vector<64x1xf32>
    %cst_88 = arith.constant 3.200000e+01 : f32
    %165 = vector.broadcast %cst_88 : f32 to vector<64x1xf32>
    %166 = arith.divf %164, %165 : vector<64x1xf32>
    %167 = arith.mulf %160, %160 : vector<64x32xf32>
    %cst_89 = arith.constant dense<0.000000e+00> : vector<64xf32>
    %168 = vector.multi_reduction <add>, %167, %cst_89 [1] : vector<64x32xf32> to vector<64xf32>
    %169 = vector.shape_cast %168 : vector<64xf32> to vector<64x1xf32>
    %cst_90 = arith.constant 3.200000e+01 : f32
    %170 = vector.broadcast %cst_90 : f32 to vector<64x1xf32>
    %171 = arith.divf %169, %170 : vector<64x1xf32>
    %172 = arith.mulf %166, %166 : vector<64x1xf32>
    %173 = arith.subf %171, %172 : vector<64x1xf32>
    %cst_91 = arith.constant 0.000000e+00 : f32
    %174 = vector.broadcast %cst_91 : f32 to vector<64x1xf32>
    %175 = arith.maximumf %173, %174 : vector<64x1xf32>
    %176 = vector.broadcast %166 : vector<64x1xf32> to vector<64x32xf32>
    %177 = arith.subf %160, %176 : vector<64x32xf32>
    %cst_92 = arith.constant 9.99999974E-6 : f32
    %178 = vector.broadcast %cst_92 : f32 to vector<64x1xf32>
    %179 = arith.addf %175, %178 : vector<64x1xf32>
    %180 = math.rsqrt %179 : vector<64x1xf32>
    %181 = vector.broadcast %180 : vector<64x1xf32> to vector<64x32xf32>
    %182 = arith.mulf %177, %181 : vector<64x32xf32>
    %183 = vector.broadcast %161 : vector<1x32xf32> to vector<64x32xf32>
    %184 = arith.mulf %182, %183 : vector<64x32xf32>
    %185 = vector.broadcast %162 : vector<1x32xf32> to vector<64x32xf32>
    %186 = arith.addf %184, %185 : vector<64x32xf32>
    %187 = vector.shape_cast %147 : vector<8x32xf32> to vector<1x8x32xf32>
    %c0_93 = arith.constant 0 : index
    %c0_94 = arith.constant 0 : index
    %c0_95 = arith.constant 0 : index
    %188 = vector.load %arg30[%c0_93, %c0_94, %c0_95] : memref<1x8x32xf32, #tpu.memory_space<vmem>>, vector<1x8x32xf32>
    tpu.vector_store %arg30[%c0_93, %c0_94, %c0_95], %187 {strides = array<i32>} : memref<1x8x32xf32, #tpu.memory_space<vmem>>, vector<1x8x32xf32>,
    %189 = vector.shape_cast %186 : vector<64x32xf32> to vector<1x64x32xf32>
    %c0_96 = arith.constant 0 : index
    %c0_97 = arith.constant 0 : index
    %c0_98 = arith.constant 0 : index
    %190 = vector.load %arg31[%c0_96, %c0_97, %c0_98] : memref<1x64x32xf32, #tpu.memory_space<vmem>>, vector<1x64x32xf32>
    tpu.vector_store %arg31[%c0_96, %c0_97, %c0_98], %189 {strides = array<i32>} : memref<1x64x32xf32, #tpu.memory_space<vmem>>, vector<1x64x32xf32>,
    return
  }
  func.func @transform_0(%arg0: i32, %arg1: i32) -> (i32, i32, i32) {
    %c0_i32 = arith.constant 0 : i32
    %c0_i32_0 = arith.constant 0 : i32
    %c0_i32_1 = arith.constant 0 : i32
    return %arg0, %c0_i32, %c0_i32_0 : i32, i32, i32
  }
  func.func @transform_1(%arg0: i32, %arg1: i32) -> (i32, i32, i32) {
    %c0_i32 = arith.constant 0 : i32
    %c0_i32_0 = arith.constant 0 : i32
    return %arg0, %arg1, %c0_i32 : i32, i32, i32
  }
  func.func @transform_2(%arg0: i32, %arg1: i32) -> (i32, i32) {
    %c0_i32 = arith.constant 0 : i32
    %c0_i32_0 = arith.constant 0 : i32
    %c0_i32_1 = arith.constant 0 : i32
    return %c0_i32, %c0_i32_0 : i32, i32
  }
  func.func @transform_3(%arg0: i32, %arg1: i32) -> (i32, i32) {
    %c0_i32 = arith.constant 0 : i32
    %c0_i32_0 = arith.constant 0 : i32
    %c0_i32_1 = arith.constant 0 : i32
    return %c0_i32, %c0_i32_0 : i32, i32
  }
  func.func @transform_4(%arg0: i32, %arg1: i32) -> (i32, i32) {
    %c0_i32 = arith.constant 0 : i32
    %c0_i32_0 = arith.constant 0 : i32
    %c0_i32_1 = arith.constant 0 : i32
    return %c0_i32, %c0_i32_0 : i32, i32
  }
  func.func @transform_5(%arg0: i32, %arg1: i32) -> (i32, i32) {
    %c0_i32 = arith.constant 0 : i32
    %c0_i32_0 = arith.constant 0 : i32
    %c0_i32_1 = arith.constant 0 : i32
    return %c0_i32, %c0_i32_0 : i32, i32
  }
  func.func @transform_6(%arg0: i32, %arg1: i32) -> (i32, i32) {
    %c0_i32 = arith.constant 0 : i32
    %c0_i32_0 = arith.constant 0 : i32
    %c0_i32_1 = arith.constant 0 : i32
    return %c0_i32, %c0_i32_0 : i32, i32
  }
  func.func @transform_7(%arg0: i32, %arg1: i32) -> (i32, i32) {
    %c0_i32 = arith.constant 0 : i32
    %c0_i32_0 = arith.constant 0 : i32
    %c0_i32_1 = arith.constant 0 : i32
    return %c0_i32, %c0_i32_0 : i32, i32
  }
  func.func @transform_8(%arg0: i32, %arg1: i32) -> (i32, i32) {
    %c0_i32 = arith.constant 0 : i32
    %c0_i32_0 = arith.constant 0 : i32
    %c0_i32_1 = arith.constant 0 : i32
    return %c0_i32, %c0_i32_0 : i32, i32
  }
  func.func @transform_9(%arg0: i32, %arg1: i32) -> (i32, i32) {
    %c0_i32 = arith.constant 0 : i32
    %c0_i32_0 = arith.constant 0 : i32
    %c0_i32_1 = arith.constant 0 : i32
    return %c0_i32, %c0_i32_0 : i32, i32
  }
  func.func @transform_10(%arg0: i32, %arg1: i32) -> (i32, i32) {
    %c0_i32 = arith.constant 0 : i32
    %c0_i32_0 = arith.constant 0 : i32
    %c0_i32_1 = arith.constant 0 : i32
    return %c0_i32, %c0_i32_0 : i32, i32
  }
  func.func @transform_11(%arg0: i32, %arg1: i32) -> (i32, i32) {
    %c0_i32 = arith.constant 0 : i32
    %c0_i32_0 = arith.constant 0 : i32
    %c0_i32_1 = arith.constant 0 : i32
    return %c0_i32, %c0_i32_0 : i32, i32
  }
  func.func @transform_12(%arg0: i32, %arg1: i32) -> (i32, i32) {
    %c0_i32 = arith.constant 0 : i32
    %c0_i32_0 = arith.constant 0 : i32
    %c0_i32_1 = arith.constant 0 : i32
    return %c0_i32, %c0_i32_0 : i32, i32
  }
  func.func @transform_13(%arg0: i32, %arg1: i32) -> (i32, i32) {
    %c0_i32 = arith.constant 0 : i32
    %c0_i32_0 = arith.constant 0 : i32
    %c0_i32_1 = arith.constant 0 : i32
    return %c0_i32, %c0_i32_0 : i32, i32
  }
  func.func @transform_14(%arg0: i32, %arg1: i32) -> (i32, i32) {
    %c0_i32 = arith.constant 0 : i32
    %c0_i32_0 = arith.constant 0 : i32
    %c0_i32_1 = arith.constant 0 : i32
    return %c0_i32, %c0_i32_0 : i32, i32
  }
  func.func @transform_15(%arg0: i32, %arg1: i32) -> (i32, i32) {
    %c0_i32 = arith.constant 0 : i32
    %c0_i32_0 = arith.constant 0 : i32
    %c0_i32_1 = arith.constant 0 : i32
    return %c0_i32, %c0_i32_0 : i32, i32
  }
  func.func @transform_16(%arg0: i32, %arg1: i32) -> (i32, i32) {
    %c0_i32 = arith.constant 0 : i32
    %c0_i32_0 = arith.constant 0 : i32
    %c0_i32_1 = arith.constant 0 : i32
    return %c0_i32, %c0_i32_0 : i32, i32
  }
  func.func @transform_17(%arg0: i32, %arg1: i32) -> (i32, i32) {
    %c0_i32 = arith.constant 0 : i32
    %c0_i32_0 = arith.constant 0 : i32
    %c0_i32_1 = arith.constant 0 : i32
    return %c0_i32, %c0_i32_0 : i32, i32
  }
  func.func @transform_18(%arg0: i32, %arg1: i32) -> (i32, i32) {
    %c0_i32 = arith.constant 0 : i32
    %c0_i32_0 = arith.constant 0 : i32
    %c0_i32_1 = arith.constant 0 : i32
    return %c0_i32, %c0_i32_0 : i32, i32
  }
  func.func @transform_19(%arg0: i32, %arg1: i32) -> (i32, i32) {
    %c0_i32 = arith.constant 0 : i32
    %c0_i32_0 = arith.constant 0 : i32
    %c0_i32_1 = arith.constant 0 : i32
    return %c0_i32, %c0_i32_0 : i32, i32
  }
  func.func @transform_20(%arg0: i32, %arg1: i32) -> (i32, i32) {
    %c0_i32 = arith.constant 0 : i32
    %c0_i32_0 = arith.constant 0 : i32
    %c0_i32_1 = arith.constant 0 : i32
    return %c0_i32, %c0_i32_0 : i32, i32
  }
  func.func @transform_21(%arg0: i32, %arg1: i32) -> (i32, i32) {
    %c0_i32 = arith.constant 0 : i32
    %c0_i32_0 = arith.constant 0 : i32
    %c0_i32_1 = arith.constant 0 : i32
    return %c0_i32, %c0_i32_0 : i32, i32
  }
  func.func @transform_22(%arg0: i32, %arg1: i32) -> (i32, i32) {
    %c0_i32 = arith.constant 0 : i32
    %c0_i32_0 = arith.constant 0 : i32
    %c0_i32_1 = arith.constant 0 : i32
    return %c0_i32, %c0_i32_0 : i32, i32
  }
  func.func @transform_23(%arg0: i32, %arg1: i32) -> (i32, i32) {
    %c0_i32 = arith.constant 0 : i32
    %c0_i32_0 = arith.constant 0 : i32
    %c0_i32_1 = arith.constant 0 : i32
    return %c0_i32, %c0_i32_0 : i32, i32
  }
  func.func @transform_24(%arg0: i32, %arg1: i32) -> (i32, i32) {
    %c0_i32 = arith.constant 0 : i32
    %c0_i32_0 = arith.constant 0 : i32
    %c0_i32_1 = arith.constant 0 : i32
    return %c0_i32, %c0_i32_0 : i32, i32
  }
  func.func @transform_25(%arg0: i32, %arg1: i32) -> (i32, i32) {
    %c0_i32 = arith.constant 0 : i32
    %c0_i32_0 = arith.constant 0 : i32
    %c0_i32_1 = arith.constant 0 : i32
    return %c0_i32, %c0_i32_0 : i32, i32
  }
  func.func @transform_26(%arg0: i32, %arg1: i32) -> (i32, i32) {
    %c0_i32 = arith.constant 0 : i32
    %c0_i32_0 = arith.constant 0 : i32
    %c0_i32_1 = arith.constant 0 : i32
    return %c0_i32, %c0_i32_0 : i32, i32
  }
  func.func @transform_27(%arg0: i32, %arg1: i32) -> (i32, i32) {
    %c0_i32 = arith.constant 0 : i32
    %c0_i32_0 = arith.constant 0 : i32
    %c0_i32_1 = arith.constant 0 : i32
    return %c0_i32, %c0_i32_0 : i32, i32
  }
  func.func @transform_28(%arg0: i32, %arg1: i32) -> (i32, i32, i32) {
    %c0_i32 = arith.constant 0 : i32
    %c0_i32_0 = arith.constant 0 : i32
    return %arg0, %arg1, %c0_i32 : i32, i32, i32
  }
  func.func @transform_29(%arg0: i32, %arg1: i32) -> (i32, i32, i32) {
    %c0_i32 = arith.constant 0 : i32
    %c0_i32_0 = arith.constant 0 : i32
    return %arg0, %arg1, %c0_i32 : i32, i32, i32
  }
}

</mosaic_0001>

<llo_original>
// kernel: tpu_custom_call.1
$region0: #{tpu_custom_call.1}
  #allocation0 [shape = 'u32[]', space=smem, size = 0x4, offset = 0x4, fixed_abs, tag = 'smem constant byte address 0x4 - core index']
  #allocation1 [shape = 'u32[72,128]{1,0:T(1,128)}', space=vmem, size = 0x9000, scoped, tag = 'internal scratch']
  #allocation2 [shape = 'f32[1,8,32]{2,1,0:T(8,128)}', space=vmem, size = 0x1000, scoped, tag = 'scratch operand']
  #allocation3 [shape = 'f32[1,8,32]{2,1,0:T(8,128)}', space=vmem, size = 0x1000, scoped, tag = 'scratch operand']
  #allocation4 [shape = 'f32[1,8,32]{2,1,0:T(8,128)}', space=vmem, size = 0x1000, scoped, tag = 'scratch operand']
  #allocation5 [shape = 'f32[1,8,32]{2,1,0:T(8,128)}', space=vmem, size = 0x1000, scoped, tag = 'scratch operand']
  %s0 = inlined_call_operand.smem [shape: u32[30], index: -1, kind: input, shape index: {}]
  %s1 = sld [smem:[%s0]]
  %s2 = scalar_lea.smem %s0, 1
  %s3 = sld [smem:[%s2]]
  %s4 = scalar_lea.smem %s0, 2
  %s5 = sld [smem:[%s4]]
  %s6 = scalar_lea.smem %s0, 3
  %s7 = sld [smem:[%s6]]
  %s8 = scalar_lea.smem %s0, 4
  %s9 = sld [smem:[%s8]]
  %s10 = scalar_lea.smem %s0, 5
  %s11 = sld [smem:[%s10]]
  %s12 = scalar_lea.smem %s0, 6
  %s13 = sld [smem:[%s12]]
  %s14 = scalar_lea.smem %s0, 7
  %s15 = sld [smem:[%s14]]
  %s16 = scalar_lea.smem %s0, 8
  %s17 = sld [smem:[%s16]]
  %s18 = scalar_lea.smem %s0, 9
  %s19 = sld [smem:[%s18]]
  %s20 = scalar_lea.smem %s0, 10
  %s21 = sld [smem:[%s20]]
  %s22 = scalar_lea.smem %s0, 11
  %s23 = sld [smem:[%s22]]
  %s24 = scalar_lea.smem %s0, 12
  %s25 = sld [smem:[%s24]]
  %s26 = scalar_lea.smem %s0, 13
  %s27 = sld [smem:[%s26]]
  %s28 = scalar_lea.smem %s0, 14
  %s29 = sld [smem:[%s28]]
  %s30 = scalar_lea.smem %s0, 15
  %s31 = sld [smem:[%s30]]
  %s32 = scalar_lea.smem %s0, 16
  %s33 = sld [smem:[%s32]]
  %s34 = scalar_lea.smem %s0, 17
  %s35 = sld [smem:[%s34]]
  %s36 = scalar_lea.smem %s0, 18
  %s37 = sld [smem:[%s36]]
  %s38 = scalar_lea.smem %s0, 19
  %s39 = sld [smem:[%s38]]
  %s40 = scalar_lea.smem %s0, 20
  %s41 = sld [smem:[%s40]]
  %s42 = scalar_lea.smem %s0, 21
  %s43 = sld [smem:[%s42]]
  %s44 = scalar_lea.smem %s0, 22
  %s45 = sld [smem:[%s44]]
  %s46 = scalar_lea.smem %s0, 23
  %s47 = sld [smem:[%s46]]
  %s48 = scalar_lea.smem %s0, 24
  %s49 = sld [smem:[%s48]]
  %s50 = scalar_lea.smem %s0, 25
  %s51 = sld [smem:[%s50]]
  %s52 = scalar_lea.smem %s0, 26
  %s53 = sld [smem:[%s52]]
  %s54 = scalar_lea.smem %s0, 27
  %s55 = sld [smem:[%s54]]
  %s56 = scalar_lea.smem %s0, 28
  %s57 = sld [smem:[%s56]]
  %s58 = scalar_lea.smem %s0, 29
  %s59 = sld [smem:[%s58]]
  %60 = xla_tuple %s57, %s59
  %s61 = sld [smem:[#allocation0]]
  $region157: #{tpu_custom_call.1} parent=0
    _
  %s63 = ssub.s32 1, %s61
  %s64 = scalar_select 0, %s63, %s61
  $region1: #{tpu_custom_call.1} parent=0
    #allocation6 [shape = 'u8[8192]{0}', space=vmem, size = 0x2000, scoped, tag = 'output window, operand 0']
    #allocation7 [shape = 's32[2]{0}', space=sflag, size = 0x8, scoped, tag = 'scoped memory for tpu_custom_call.1']
    %65 = vsyncpa [#allocation7], 0
    %s66 = scalar_lea.sflag [#allocation7], 1
    %67 = vsyncpa %s66, 0
    loop: start=0, step=1, limit=4
    $region2: #{tpu_custom_call.1} parent=1 // loop_pre_header
      _
    $region3: #{tpu_custom_call.1} parent=1 // loop_header
      %s69 = sphi 0, %s73
      %p70 = scmp.ge.s32.totalorder %s69, 4
      %s76 = sphi 0, %s88
      %s77 = sphi 0, %s84
      %s78 = sphi 0, %s76
      %s79 = sphi 0, %s77
      %s80 = sphi 0, %s78
      %s81 = sphi 0, %s79
      %s91 = sphi 0, %s93
      %s94 = sphi 0, %s91
      %s95 = sphi 0, %s94
      %s111 = sphi 0, %s95
      %s119 = sphi 0, %s121
      %s122 = sphi 0, %s119
      %s123 = sphi 0, %s122
      %s139 = sphi 0, %s123
      %s143 = sphi 0, %s143
      %s145 = sphi 0, %s143
      %s146 = sphi 0, %s145
      %s160 = sphi 0, %s146
      %s164 = sphi 0, %s164
      %s166 = sphi 0, %s164
      %s167 = sphi 0, %s166
      %s181 = sphi 0, %s167
      %s185 = sphi 0, %s185
      %s187 = sphi 0, %s185
      %s188 = sphi 0, %s187
      %s202 = sphi 0, %s188
      %s206 = sphi 0, %s206
      %s208 = sphi 0, %s206
      %s209 = sphi 0, %s208
      %s223 = sphi 0, %s209
      %s227 = sphi 0, %s227
      %s229 = sphi 0, %s227
      %s230 = sphi 0, %s229
      %s244 = sphi 0, %s230
      %s248 = sphi 0, %s248
      %s250 = sphi 0, %s248
      %s251 = sphi 0, %s250
      %s265 = sphi 0, %s251
      %s269 = sphi 0, %s269
      %s271 = sphi 0, %s269
      %s272 = sphi 0, %s271
      %s286 = sphi 0, %s272
      %s290 = sphi 0, %s290
      %s292 = sphi 0, %s290
      %s293 = sphi 0, %s292
      %s307 = sphi 0, %s293
      %s311 = sphi 0, %s311
      %s313 = sphi 0, %s311
      %s314 = sphi 0, %s313
      %s328 = sphi 0, %s314
      %s332 = sphi 0, %s332
      %s334 = sphi 0, %s332
      %s335 = sphi 0, %s334
      %s349 = sphi 0, %s335
      %s353 = sphi 0, %s353
      %s355 = sphi 0, %s353
      %s356 = sphi 0, %s355
      %s370 = sphi 0, %s356
      %s374 = sphi 0, %s374
      %s376 = sphi 0, %s374
      %s377 = sphi 0, %s376
      %s391 = sphi 0, %s377
      %s395 = sphi 0, %s395
      %s397 = sphi 0, %s395
      %s398 = sphi 0, %s397
      %s412 = sphi 0, %s398
      %s416 = sphi 0, %s416
      %s418 = sphi 0, %s416
      %s419 = sphi 0, %s418
      %s433 = sphi 0, %s419
      %s437 = sphi 0, %s437
      %s439 = sphi 0, %s437
      %s440 = sphi 0, %s439
      %s454 = sphi 0, %s440
      %s458 = sphi 0, %s458
      %s460 = sphi 0, %s458
      %s461 = sphi 0, %s460
      %s475 = sphi 0, %s461
      %s479 = sphi 0, %s479
      %s481 = sphi 0, %s479
      %s482 = sphi 0, %s481
      %s496 = sphi 0, %s482
      %s500 = sphi 0, %s500
      %s502 = sphi 0, %s500
      %s503 = sphi 0, %s502
      %s517 = sphi 0, %s503
      %s521 = sphi 0, %s521
      %s523 = sphi 0, %s521
      %s524 = sphi 0, %s523
      %s538 = sphi 0, %s524
      %s542 = sphi 0, %s542
      %s544 = sphi 0, %s542
      %s545 = sphi 0, %s544
      %s559 = sphi 0, %s545
      %s563 = sphi 0, %s563
      %s565 = sphi 0, %s563
      %s566 = sphi 0, %s565
      %s580 = sphi 0, %s566
      %s584 = sphi 0, %s584
      %s586 = sphi 0, %s584
      %s587 = sphi 0, %s586
      %s601 = sphi 0, %s587
      %s605 = sphi 0, %s605
      %s607 = sphi 0, %s605
      %s608 = sphi 0, %s607
      %s622 = sphi 0, %s608
      %s626 = sphi 0, %s626
      %s628 = sphi 0, %s626
      %s629 = sphi 0, %s628
      %s643 = sphi 0, %s629
      %s647 = sphi 0, %s647
      %s649 = sphi 0, %s647
      %s650 = sphi 0, %s649
      %s664 = sphi 0, %s650
      %s668 = sphi 0, %s668
      %s670 = sphi 0, %s668
      %s671 = sphi 0, %s670
      %s685 = sphi 0, %s671
      %s693 = sphi 0, %s695
      %s696 = sphi 0, %s693
      %s697 = sphi 0, %s696
      %s713 = sphi 0, %s697
      %s721 = sphi 0, %s723
      %s724 = sphi 0, %s721
      %s725 = sphi 0, %s724
      %s741 = sphi 0, %s725
    $region4: #{tpu_custom_call.1} parent=1 // loop_header_branch
      %72 = sbr.rel (%p70) target = $region8
    $region5: #{tpu_custom_call.1} parent=1 // loop_body
      %s74 = ssub.s32 %s69, 1
      %s75 = ssub.s32 %s69, 2
      %s82 = sadd.s32 1, %s77
      %p83 = scmp.ge.s32.totalorder %s82, 1
      %s84 = scalar_select %p83, 0, %s82
      %s85 = sadd.s32 1, %s76
      %s86 = scalar_select %p83, %s85, %s76
      %p87 = scmp.ge.s32.totalorder %s86, 2
      %s88 = scalar_select %p87, 0, %s86
      %s89 = ssub.s32 %s76, %s88
      %p90 = scmp.eq.s32.totalorder %s89, 0
      %s92 = sadd.s32 %s91, 1
      %s93 = scalar_select %p90, %s91, %s92
      %p96 = pneg %p90
      %p97 = scmp.eq.s32.totalorder %s69, 1
      %p98 = por %p96, %p97
      %p99 = scmp.ne.s32.totalorder %s91, %s94
      %p100 = scmp.eq.s32.totalorder %s69, 0
      %p101 = por %p99, %p100
      %p102 = scmp.ne.s32.totalorder %s91, %s94
      %p103 = scmp.eq.s32.totalorder %s74, 1
      %p104 = por %p102, %p103
      %p105 = scmp.ne.s32.totalorder %s94, %s95
      %p106 = scmp.eq.s32.totalorder %s74, 0
      %p107 = por %p105, %p106
      %p108 = scmp.ne.s32.totalorder %s94, %s95
      %p109 = scmp.eq.s32.totalorder %s75, 1
      %p110 = por %p108, %p109
      %p112 = scmp.ne.s32.totalorder %s95, %s111
      %p113 = scmp.eq.s32.totalorder %s75, 0
      %p114 = por %p112, %p113
      %s115 = ssub.s32 %s76, %s88
      %s116 = ssub.s32 %s77, %s84
      %s117 = sor.u32 %s115, %s116
      %p118 = scmp.eq.s32.totalorder %s117, 0
      %s120 = sadd.s32 %s119, 1
      %s121 = scalar_select %p118, %s119, %s120
      %p124 = pneg %p118
      %p125 = scmp.eq.s32.totalorder %s69, 1
      %p126 = por %p124, %p125
      %p127 = scmp.ne.s32.totalorder %s119, %s122
      %p128 = scmp.eq.s32.totalorder %s69, 0
      %p129 = por %p127, %p128
      %p130 = scmp.ne.s32.totalorder %s119, %s122
      %p131 = scmp.eq.s32.totalorder %s74, 1
      %p132 = por %p130, %p131
      %p133 = scmp.ne.s32.totalorder %s122, %s123
      %p134 = scmp.eq.s32.totalorder %s74, 0
      %p135 = por %p133, %p134
      %p136 = scmp.ne.s32.totalorder %s122, %s123
      %p137 = scmp.eq.s32.totalorder %s75, 1
      %p138 = por %p136, %p137
      %p140 = scmp.ne.s32.totalorder %s123, %s139
      %p141 = scmp.eq.s32.totalorder %s75, 0
      %p142 = por %p140, %p141
      %s144 = sadd.s32 %s143, 1
      %p147 = scmp.eq.s32.totalorder %s69, 1
      %p148 = scmp.ne.s32.totalorder %s143, %s145
      %p149 = scmp.eq.s32.totalorder %s69, 0
      %p150 = por %p148, %p149
      %p151 = scmp.ne.s32.totalorder %s143, %s145
      %p152 = scmp.eq.s32.totalorder %s74, 1
      %p153 = por %p151, %p152
      %p154 = scmp.ne.s32.totalorder %s145, %s146
      %p155 = scmp.eq.s32.totalorder %s74, 0
      %p156 = por %p154, %p155
      %p157 = scmp.ne.s32.totalorder %s145, %s146
      %p158 = scmp.eq.s32.totalorder %s75, 1
      %p159 = por %p157, %p158
      %p161 = scmp.ne.s32.totalorder %s146, %s160
      %p162 = scmp.eq.s32.totalorder %s75, 0
      %p163 = por %p161, %p162
      %s165 = sadd.s32 %s164, 1
      %p168 = scmp.eq.s32.totalorder %s69, 1
      %p169 = scmp.ne.s32.totalorder %s164, %s166
      %p170 = scmp.eq.s32.totalorder %s69, 0
      %p171 = por %p169, %p170
      %p172 = scmp.ne.s32.totalorder %s164, %s166
      %p173 = scmp.eq.s32.totalorder %s74, 1
      %p174 = por %p172, %p173
      %p175 = scmp.ne.s32.totalorder %s166, %s167
      %p176 = scmp.eq.s32.totalorder %s74, 0
      %p177 = por %p175, %p176
      %p178 = scmp.ne.s32.totalorder %s166, %s167
      %p179 = scmp.eq.s32.totalorder %s75, 1
      %p180 = por %p178, %p179
      %p182 = scmp.ne.s32.totalorder %s167, %s181
      %p183 = scmp.eq.s32.totalorder %s75, 0
      %p184 = por %p182, %p183
      %s186 = sadd.s32 %s185, 1
      %p189 = scmp.eq.s32.totalorder %s69, 1
      %p190 = scmp.ne.s32.totalorder %s185, %s187
      %p191 = scmp.eq.s32.totalorder %s69, 0
      %p192 = por %p190, %p191
      %p193 = scmp.ne.s32.totalorder %s185, %s187
      %p194 = scmp.eq.s32.totalorder %s74, 1
      %p195 = por %p193, %p194
      %p196 = scmp.ne.s32.totalorder %s187, %s188
      %p197 = scmp.eq.s32.totalorder %s74, 0
      %p198 = por %p196, %p197
      %p199 = scmp.ne.s32.totalorder %s187, %s188
      %p200 = scmp.eq.s32.totalorder %s75, 1
      %p201 = por %p199, %p200
      %p203 = scmp.ne.s32.totalorder %s188, %s202
      %p204 = scmp.eq.s32.totalorder %s75, 0
      %p205 = por %p203, %p204
      %s207 = sadd.s32 %s206, 1
      %p210 = scmp.eq.s32.totalorder %s69, 1
      %p211 = scmp.ne.s32.totalorder %s206, %s208
      %p212 = scmp.eq.s32.totalorder %s69, 0
      %p213 = por %p211, %p212
      %p214 = scmp.ne.s32.totalorder %s206, %s208
      %p215 = scmp.eq.s32.totalorder %s74, 1
      %p216 = por %p214, %p215
      %p217 = scmp.ne.s32.totalorder %s208, %s209
      %p218 = scmp.eq.s32.totalorder %s74, 0
      %p219 = por %p217, %p218
      %p220 = scmp.ne.s32.totalorder %s208, %s209
      %p221 = scmp.eq.s32.totalorder %s75, 1
      %p222 = por %p220, %p221
      %p224 = scmp.ne.s32.totalorder %s209, %s223
      %p225 = scmp.eq.s32.totalorder %s75, 0
      %p226 = por %p224, %p225
      %s228 = sadd.s32 %s227, 1
      %p231 = scmp.eq.s32.totalorder %s69, 1
      %p232 = scmp.ne.s32.totalorder %s227, %s229
      %p233 = scmp.eq.s32.totalorder %s69, 0
      %p234 = por %p232, %p233
      %p235 = scmp.ne.s32.totalorder %s227, %s229
      %p236 = scmp.eq.s32.totalorder %s74, 1
      %p237 = por %p235, %p236
      %p238 = scmp.ne.s32.totalorder %s229, %s230
      %p239 = scmp.eq.s32.totalorder %s74, 0
      %p240 = por %p238, %p239
      %p241 = scmp.ne.s32.totalorder %s229, %s230
      %p242 = scmp.eq.s32.totalorder %s75, 1
      %p243 = por %p241, %p242
      %p245 = scmp.ne.s32.totalorder %s230, %s244
      %p246 = scmp.eq.s32.totalorder %s75, 0
      %p247 = por %p245, %p246
      %s249 = sadd.s32 %s248, 1
      %p252 = scmp.eq.s32.totalorder %s69, 1
      %p253 = scmp.ne.s32.totalorder %s248, %s250
      %p254 = scmp.eq.s32.totalorder %s69, 0
      %p255 = por %p253, %p254
      %p256 = scmp.ne.s32.totalorder %s248, %s250
      %p257 = scmp.eq.s32.totalorder %s74, 1
      %p258 = por %p256, %p257
      %p259 = scmp.ne.s32.totalorder %s250, %s251
      %p260 = scmp.eq.s32.totalorder %s74, 0
      %p261 = por %p259, %p260
      %p262 = scmp.ne.s32.totalorder %s250, %s251
      %p263 = scmp.eq.s32.totalorder %s75, 1
      %p264 = por %p262, %p263
      %p266 = scmp.ne.s32.totalorder %s251, %s265
      %p267 = scmp.eq.s32.totalorder %s75, 0
      %p268 = por %p266, %p267
      %s270 = sadd.s32 %s269, 1
      %p273 = scmp.eq.s32.totalorder %s69, 1
      %p274 = scmp.ne.s32.totalorder %s269, %s271
      %p275 = scmp.eq.s32.totalorder %s69, 0
      %p276 = por %p274, %p275
      %p277 = scmp.ne.s32.totalorder %s269, %s271
      %p278 = scmp.eq.s32.totalorder %s74, 1
      %p279 = por %p277, %p278
      %p280 = scmp.ne.s32.totalorder %s271, %s272
      %p281 = scmp.eq.s32.totalorder %s74, 0
      %p282 = por %p280, %p281
      %p283 = scmp.ne.s32.totalorder %s271, %s272
      %p284 = scmp.eq.s32.totalorder %s75, 1
      %p285 = por %p283, %p284
      %p287 = scmp.ne.s32.totalorder %s272, %s286
      %p288 = scmp.eq.s32.totalorder %s75, 0
      %p289 = por %p287, %p288
      %s291 = sadd.s32 %s290, 1
      %p294 = scmp.eq.s32.totalorder %s69, 1
      %p295 = scmp.ne.s32.totalorder %s290, %s292
      %p296 = scmp.eq.s32.totalorder %s69, 0
      %p297 = por %p295, %p296
      %p298 = scmp.ne.s32.totalorder %s290, %s292
      %p299 = scmp.eq.s32.totalorder %s74, 1
      %p300 = por %p298, %p299
      %p301 = scmp.ne.s32.totalorder %s292, %s293
      %p302 = scmp.eq.s32.totalorder %s74, 0
      %p303 = por %p301, %p302
      %p304 = scmp.ne.s32.totalorder %s292, %s293
      %p305 = scmp.eq.s32.totalorder %s75, 1
      %p306 = por %p304, %p305
      %p308 = scmp.ne.s32.totalorder %s293, %s307
      %p309 = scmp.eq.s32.totalorder %s75, 0
      %p310 = por %p308, %p309
      %s312 = sadd.s32 %s311, 1
      %p315 = scmp.eq.s32.totalorder %s69, 1
      %p316 = scmp.ne.s32.totalorder %s311, %s313
      %p317 = scmp.eq.s32.totalorder %s69, 0
      %p318 = por %p316, %p317
      %p319 = scmp.ne.s32.totalorder %s311, %s313
      %p320 = scmp.eq.s32.totalorder %s74, 1
      %p321 = por %p319, %p320
      %p322 = scmp.ne.s32.totalorder %s313, %s314
      %p323 = scmp.eq.s32.totalorder %s74, 0
      %p324 = por %p322, %p323
      %p325 = scmp.ne.s32.totalorder %s313, %s314
      %p326 = scmp.eq.s32.totalorder %s75, 1
      %p327 = por %p325, %p326
      %p329 = scmp.ne.s32.totalorder %s314, %s328
      %p330 = scmp.eq.s32.totalorder %s75, 0
      %p331 = por %p329, %p330
      %s333 = sadd.s32 %s332, 1
      %p336 = scmp.eq.s32.totalorder %s69, 1
      %p337 = scmp.ne.s32.totalorder %s332, %s334
      %p338 = scmp.eq.s32.totalorder %s69, 0
      %p339 = por %p337, %p338
      %p340 = scmp.ne.s32.totalorder %s332, %s334
      %p341 = scmp.eq.s32.totalorder %s74, 1
      %p342 = por %p340, %p341
      %p343 = scmp.ne.s32.totalorder %s334, %s335
      %p344 = scmp.eq.s32.totalorder %s74, 0
      %p345 = por %p343, %p344
      %p346 = scmp.ne.s32.totalorder %s334, %s335
      %p347 = scmp.eq.s32.totalorder %s75, 1
      %p348 = por %p346, %p347
      %p350 = scmp.ne.s32.totalorder %s335, %s349
      %p351 = scmp.eq.s32.totalorder %s75, 0
      %p352 = por %p350, %p351
      %s354 = sadd.s32 %s353, 1
      %p357 = scmp.eq.s32.totalorder %s69, 1
      %p358 = scmp.ne.s32.totalorder %s353, %s355
      %p359 = scmp.eq.s32.totalorder %s69, 0
      %p360 = por %p358, %p359
      %p361 = scmp.ne.s32.totalorder %s353, %s355
      %p362 = scmp.eq.s32.totalorder %s74, 1
      %p363 = por %p361, %p362
      %p364 = scmp.ne.s32.totalorder %s355, %s356
      %p365 = scmp.eq.s32.totalorder %s74, 0
      %p366 = por %p364, %p365
      %p367 = scmp.ne.s32.totalorder %s355, %s356
      %p368 = scmp.eq.s32.totalorder %s75, 1
      %p369 = por %p367, %p368
      %p371 = scmp.ne.s32.totalorder %s356, %s370
      %p372 = scmp.eq.s32.totalorder %s75, 0
      %p373 = por %p371, %p372
      %s375 = sadd.s32 %s374, 1
      %p378 = scmp.eq.s32.totalorder %s69, 1
      %p379 = scmp.ne.s32.totalorder %s374, %s376
      %p380 = scmp.eq.s32.totalorder %s69, 0
      %p381 = por %p379, %p380
      %p382 = scmp.ne.s32.totalorder %s374, %s376
      %p383 = scmp.eq.s32.totalorder %s74, 1
      %p384 = por %p382, %p383
      %p385 = scmp.ne.s32.totalorder %s376, %s377
      %p386 = scmp.eq.s32.totalorder %s74, 0
      %p387 = por %p385, %p386
      %p388 = scmp.ne.s32.totalorder %s376, %s377
      %p389 = scmp.eq.s32.totalorder %s75, 1
      %p390 = por %p388, %p389
      %p392 = scmp.ne.s32.totalorder %s377, %s391
      %p393 = scmp.eq.s32.totalorder %s75, 0
      %p394 = por %p392, %p393
      %s396 = sadd.s32 %s395, 1
      %p399 = scmp.eq.s32.totalorder %s69, 1
      %p400 = scmp.ne.s32.totalorder %s395, %s397
      %p401 = scmp.eq.s32.totalorder %s69, 0
      %p402 = por %p400, %p401
      %p403 = scmp.ne.s32.totalorder %s395, %s397
      %p404 = scmp.eq.s32.totalorder %s74, 1
      %p405 = por %p403, %p404
      %p406 = scmp.ne.s32.totalorder %s397, %s398
      %p407 = scmp.eq.s32.totalorder %s74, 0
      %p408 = por %p406, %p407
      %p409 = scmp.ne.s32.totalorder %s397, %s398
      %p410 = scmp.eq.s32.totalorder %s75, 1
      %p411 = por %p409, %p410
      %p413 = scmp.ne.s32.totalorder %s398, %s412
      %p414 = scmp.eq.s32.totalorder %s75, 0
      %p415 = por %p413, %p414
      %s417 = sadd.s32 %s416, 1
      %p420 = scmp.eq.s32.totalorder %s69, 1
      %p421 = scmp.ne.s32.totalorder %s416, %s418
      %p422 = scmp.eq.s32.totalorder %s69, 0
      %p423 = por %p421, %p422
      %p424 = scmp.ne.s32.totalorder %s416, %s418
      %p425 = scmp.eq.s32.totalorder %s74, 1
      %p426 = por %p424, %p425
      %p427 = scmp.ne.s32.totalorder %s418, %s419
      %p428 = scmp.eq.s32.totalorder %s74, 0
      %p429 = por %p427, %p428
      %p430 = scmp.ne.s32.totalorder %s418, %s419
      %p431 = scmp.eq.s32.totalorder %s75, 1
      %p432 = por %p430, %p431
      %p434 = scmp.ne.s32.totalorder %s419, %s433
      %p435 = scmp.eq.s32.totalorder %s75, 0
      %p436 = por %p434, %p435
      %s438 = sadd.s32 %s437, 1
      %p441 = scmp.eq.s32.totalorder %s69, 1
      %p442 = scmp.ne.s32.totalorder %s437, %s439
      %p443 = scmp.eq.s32.totalorder %s69, 0
      %p444 = por %p442, %p443
      %p445 = scmp.ne.s32.totalorder %s437, %s439
      %p446 = scmp.eq.s32.totalorder %s74, 1
      %p447 = por %p445, %p446
      %p448 = scmp.ne.s32.totalorder %s439, %s440
      %p449 = scmp.eq.s32.totalorder %s74, 0
      %p450 = por %p448, %p449
      %p451 = scmp.ne.s32.totalorder %s439, %s440
      %p452 = scmp.eq.s32.totalorder %s75, 1
      %p453 = por %p451, %p452
      %p455 = scmp.ne.s32.totalorder %s440, %s454
      %p456 = scmp.eq.s32.totalorder %s75, 0
      %p457 = por %p455, %p456
      %s459 = sadd.s32 %s458, 1
      %p462 = scmp.eq.s32.totalorder %s69, 1
      %p463 = scmp.ne.s32.totalorder %s458, %s460
      %p464 = scmp.eq.s32.totalorder %s69, 0
      %p465 = por %p463, %p464
      %p466 = scmp.ne.s32.totalorder %s458, %s460
      %p467 = scmp.eq.s32.totalorder %s74, 1
      %p468 = por %p466, %p467
      %p469 = scmp.ne.s32.totalorder %s460, %s461
      %p470 = scmp.eq.s32.totalorder %s74, 0
      %p471 = por %p469, %p470
      %p472 = scmp.ne.s32.totalorder %s460, %s461
      %p473 = scmp.eq.s32.totalorder %s75, 1
      %p474 = por %p472, %p473
      %p476 = scmp.ne.s32.totalorder %s461, %s475
      %p477 = scmp.eq.s32.totalorder %s75, 0
      %p478 = por %p476, %p477
      %s480 = sadd.s32 %s479, 1
      %p483 = scmp.eq.s32.totalorder %s69, 1
      %p484 = scmp.ne.s32.totalorder %s479, %s481
      %p485 = scmp.eq.s32.totalorder %s69, 0
      %p486 = por %p484, %p485
      %p487 = scmp.ne.s32.totalorder %s479, %s481
      %p488 = scmp.eq.s32.totalorder %s74, 1
      %p489 = por %p487, %p488
      %p490 = scmp.ne.s32.totalorder %s481, %s482
      %p491 = scmp.eq.s32.totalorder %s74, 0
      %p492 = por %p490, %p491
      %p493 = scmp.ne.s32.totalorder %s481, %s482
      %p494 = scmp.eq.s32.totalorder %s75, 1
      %p495 = por %p493, %p494
      %p497 = scmp.ne.s32.totalorder %s482, %s496
      %p498 = scmp.eq.s32.totalorder %s75, 0
      %p499 = por %p497, %p498
      %s501 = sadd.s32 %s500, 1
      %p504 = scmp.eq.s32.totalorder %s69, 1
      %p505 = scmp.ne.s32.totalorder %s500, %s502
      %p506 = scmp.eq.s32.totalorder %s69, 0
      %p507 = por %p505, %p506
      %p508 = scmp.ne.s32.totalorder %s500, %s502
      %p509 = scmp.eq.s32.totalorder %s74, 1
      %p510 = por %p508, %p509
      %p511 = scmp.ne.s32.totalorder %s502, %s503
      %p512 = scmp.eq.s32.totalorder %s74, 0
      %p513 = por %p511, %p512
      %p514 = scmp.ne.s32.totalorder %s502, %s503
      %p515 = scmp.eq.s32.totalorder %s75, 1
      %p516 = por %p514, %p515
      %p518 = scmp.ne.s32.totalorder %s503, %s517
      %p519 = scmp.eq.s32.totalorder %s75, 0
      %p520 = por %p518, %p519
      %s522 = sadd.s32 %s521, 1
      %p525 = scmp.eq.s32.totalorder %s69, 1
      %p526 = scmp.ne.s32.totalorder %s521, %s523
      %p527 = scmp.eq.s32.totalorder %s69, 0
      %p528 = por %p526, %p527
      %p529 = scmp.ne.s32.totalorder %s521, %s523
      %p530 = scmp.eq.s32.totalorder %s74, 1
      %p531 = por %p529, %p530
      %p532 = scmp.ne.s32.totalorder %s523, %s524
      %p533 = scmp.eq.s32.totalorder %s74, 0
      %p534 = por %p532, %p533
      %p535 = scmp.ne.s32.totalorder %s523, %s524
      %p536 = scmp.eq.s32.totalorder %s75, 1
      %p537 = por %p535, %p536
      %p539 = scmp.ne.s32.totalorder %s524, %s538
      %p540 = scmp.eq.s32.totalorder %s75, 0
      %p541 = por %p539, %p540
      %s543 = sadd.s32 %s542, 1
      %p546 = scmp.eq.s32.totalorder %s69, 1
      %p547 = scmp.ne.s32.totalorder %s542, %s544
      %p548 = scmp.eq.s32.totalorder %s69, 0
      %p549 = por %p547, %p548
      %p550 = scmp.ne.s32.totalorder %s542, %s544
      %p551 = scmp.eq.s32.totalorder %s74, 1
      %p552 = por %p550, %p551
      %p553 = scmp.ne.s32.totalorder %s544, %s545
      %p554 = scmp.eq.s32.totalorder %s74, 0
      %p555 = por %p553, %p554
      %p556 = scmp.ne.s32.totalorder %s544, %s545
      %p557 = scmp.eq.s32.totalorder %s75, 1
      %p558 = por %p556, %p557
      %p560 = scmp.ne.s32.totalorder %s545, %s559
      %p561 = scmp.eq.s32.totalorder %s75, 0
      %p562 = por %p560, %p561
      %s564 = sadd.s32 %s563, 1
      %p567 = scmp.eq.s32.totalorder %s69, 1
      %p568 = scmp.ne.s32.totalorder %s563, %s565
      %p569 = scmp.eq.s32.totalorder %s69, 0
      %p570 = por %p568, %p569
      %p571 = scmp.ne.s32.totalorder %s563, %s565
      %p572 = scmp.eq.s32.totalorder %s74, 1
      %p573 = por %p571, %p572
      %p574 = scmp.ne.s32.totalorder %s565, %s566
      %p575 = scmp.eq.s32.totalorder %s74, 0
      %p576 = por %p574, %p575
      %p577 = scmp.ne.s32.totalorder %s565, %s566
      %p578 = scmp.eq.s32.totalorder %s75, 1
      %p579 = por %p577, %p578
      %p581 = scmp.ne.s32.totalorder %s566, %s580
      %p582 = scmp.eq.s32.totalorder %s75, 0
      %p583 = por %p581, %p582
      %s585 = sadd.s32 %s584, 1
      %p588 = scmp.eq.s32.totalorder %s69, 1
      %p589 = scmp.ne.s32.totalorder %s584, %s586
      %p590 = scmp.eq.s32.totalorder %s69, 0
      %p591 = por %p589, %p590
      %p592 = scmp.ne.s32.totalorder %s584, %s586
      %p593 = scmp.eq.s32.totalorder %s74, 1
      %p594 = por %p592, %p593
      %p595 = scmp.ne.s32.totalorder %s586, %s587
      %p596 = scmp.eq.s32.totalorder %s74, 0
      %p597 = por %p595, %p596
      %p598 = scmp.ne.s32.totalorder %s586, %s587
      %p599 = scmp.eq.s32.totalorder %s75, 1
      %p600 = por %p598, %p599
      %p602 = scmp.ne.s32.totalorder %s587, %s601
      %p603 = scmp.eq.s32.totalorder %s75, 0
      %p604 = por %p602, %p603
      %s606 = sadd.s32 %s605, 1
      %p609 = scmp.eq.s32.totalorder %s69, 1
      %p610 = scmp.ne.s32.totalorder %s605, %s607
      %p611 = scmp.eq.s32.totalorder %s69, 0
      %p612 = por %p610, %p611
      %p613 = scmp.ne.s32.totalorder %s605, %s607
      %p614 = scmp.eq.s32.totalorder %s74, 1
      %p615 = por %p613, %p614
      %p616 = scmp.ne.s32.totalorder %s607, %s608
      %p617 = scmp.eq.s32.totalorder %s74, 0
      %p618 = por %p616, %p617
      %p619 = scmp.ne.s32.totalorder %s607, %s608
      %p620 = scmp.eq.s32.totalorder %s75, 1
      %p621 = por %p619, %p620
      %p623 = scmp.ne.s32.totalorder %s608, %s622
      %p624 = scmp.eq.s32.totalorder %s75, 0
      %p625 = por %p623, %p624
      %s627 = sadd.s32 %s626, 1
      %p630 = scmp.eq.s32.totalorder %s69, 1
      %p631 = scmp.ne.s32.totalorder %s626, %s628
      %p632 = scmp.eq.s32.totalorder %s69, 0
      %p633 = por %p631, %p632
      %p634 = scmp.ne.s32.totalorder %s626, %s628
      %p635 = scmp.eq.s32.totalorder %s74, 1
      %p636 = por %p634, %p635
      %p637 = scmp.ne.s32.totalorder %s628, %s629
      %p638 = scmp.eq.s32.totalorder %s74, 0
      %p639 = por %p637, %p638
      %p640 = scmp.ne.s32.totalorder %s628, %s629
      %p641 = scmp.eq.s32.totalorder %s75, 1
      %p642 = por %p640, %p641
      %p644 = scmp.ne.s32.totalorder %s629, %s643
      %p645 = scmp.eq.s32.totalorder %s75, 0
      %p646 = por %p644, %p645
      %s648 = sadd.s32 %s647, 1
      %p651 = scmp.eq.s32.totalorder %s69, 1
      %p652 = scmp.ne.s32.totalorder %s647, %s649
      %p653 = scmp.eq.s32.totalorder %s69, 0
      %p654 = por %p652, %p653
      %p655 = scmp.ne.s32.totalorder %s647, %s649
      %p656 = scmp.eq.s32.totalorder %s74, 1
      %p657 = por %p655, %p656
      %p658 = scmp.ne.s32.totalorder %s649, %s650
      %p659 = scmp.eq.s32.totalorder %s74, 0
      %p660 = por %p658, %p659
      %p661 = scmp.ne.s32.totalorder %s649, %s650
      %p662 = scmp.eq.s32.totalorder %s75, 1
      %p663 = por %p661, %p662
      %p665 = scmp.ne.s32.totalorder %s650, %s664
      %p666 = scmp.eq.s32.totalorder %s75, 0
      %p667 = por %p665, %p666
      %s669 = sadd.s32 %s668, 1
      %p672 = scmp.eq.s32.totalorder %s69, 1
      %p673 = scmp.ne.s32.totalorder %s668, %s670
      %p674 = scmp.eq.s32.totalorder %s69, 0
      %p675 = por %p673, %p674
      %p676 = scmp.ne.s32.totalorder %s668, %s670
      %p677 = scmp.eq.s32.totalorder %s74, 1
      %p678 = por %p676, %p677
      %p679 = scmp.ne.s32.totalorder %s670, %s671
      %p680 = scmp.eq.s32.totalorder %s74, 0
      %p681 = por %p679, %p680
      %p682 = scmp.ne.s32.totalorder %s670, %s671
      %p683 = scmp.eq.s32.totalorder %s75, 1
      %p684 = por %p682, %p683
      %p686 = scmp.ne.s32.totalorder %s671, %s685
      %p687 = scmp.eq.s32.totalorder %s75, 0
      %p688 = por %p686, %p687
      %s689 = ssub.s32 %s76, %s88
      %s690 = ssub.s32 %s77, %s84
      %s691 = sor.u32 %s689, %s690
      %p692 = scmp.eq.s32.totalorder %s691, 0
      %s694 = sadd.s32 %s693, 1
      %s695 = scalar_select %p692, %s693, %s694
      %p698 = pneg %p692
      %p699 = scmp.eq.s32.totalorder %s69, 1
      %p700 = por %p698, %p699
      %p701 = scmp.ne.s32.totalorder %s693, %s696
      %p702 = scmp.eq.s32.totalorder %s69, 0
      %p703 = por %p701, %p702
      %p704 = scmp.ne.s32.totalorder %s693, %s696
      %p705 = scmp.eq.s32.totalorder %s74, 1
      %p706 = por %p704, %p705
      %p707 = scmp.ne.s32.totalorder %s696, %s697
      %p708 = scmp.eq.s32.totalorder %s74, 0
      %p709 = por %p707, %p708
      %p710 = scmp.ne.s32.totalorder %s696, %s697
      %p711 = scmp.eq.s32.totalorder %s75, 1
      %p712 = por %p710, %p711
      %p714 = scmp.ne.s32.totalorder %s697, %s713
      %p715 = scmp.eq.s32.totalorder %s75, 0
      %p716 = por %p714, %p715
      %s717 = ssub.s32 %s76, %s88
      %s718 = ssub.s32 %s77, %s84
      %s719 = sor.u32 %s717, %s718
      %p720 = scmp.eq.s32.totalorder %s719, 0
      %s722 = sadd.s32 %s721, 1
      %s723 = scalar_select %p720, %s721, %s722
      %p726 = pneg %p720
      %p727 = scmp.eq.s32.totalorder %s69, 1
      %p728 = por %p726, %p727
      %p729 = scmp.ne.s32.totalorder %s721, %s724
      %p730 = scmp.eq.s32.totalorder %s69, 0
      %p731 = por %p729, %p730
      %p732 = scmp.ne.s32.totalorder %s721, %s724
      %p733 = scmp.eq.s32.totalorder %s74, 1
      %p734 = por %p732, %p733
      %p735 = scmp.ne.s32.totalorder %s724, %s725
      %p736 = scmp.eq.s32.totalorder %s74, 0
      %p737 = por %p735, %p736
      %p738 = scmp.ne.s32.totalorder %s724, %s725
      %p739 = scmp.eq.s32.totalorder %s75, 1
      %p740 = por %p738, %p739
      %p742 = scmp.ne.s32.totalorder %s725, %s741
      %p743 = scmp.eq.s32.totalorder %s75, 0
      %p744 = por %p742, %p743
      %p745 = scmp.le.s32.totalorder 1, %s69
      %p746 = scmp.lt.s32.totalorder %s69, 3
      %p747 = pnand %p745, %p746
      %p748 = pneg %p747
      // Predicated region
      $region9: #{tpu_custom_call.1} parent=5 // pred_check
        _
      $region10: #{tpu_custom_call.1} parent=5 // pred_check_branch
        %750 = sbr.rel (%p747) target = $region12
      $region11: #{tpu_custom_call.1} parent=5 // pred_region
        %s751 = ssub.s32 %s69, 1
        // Predicated region
        $region13: #{tpu_custom_call.1} parent=11 // pred_check
          %p752 = pneg %p156
        $region14: #{tpu_custom_call.1} parent=11 // pred_check_branch
          %754 = sbr.rel (%p752) target = $region16
        $region15: #{tpu_custom_call.1} parent=11 // pred_region
          _
        $region16: #{tpu_custom_call.1} parent=11 // pred_fallthru
          _
        // Predicated region
        $region17: #{tpu_custom_call.1} parent=11 // pred_check
          %p755 = pneg %p177
        $region18: #{tpu_custom_call.1} parent=11 // pred_check_branch
          %757 = sbr.rel (%p755) target = $region20
        $region19: #{tpu_custom_call.1} parent=11 // pred_region
          _
        $region20: #{tpu_custom_call.1} parent=11 // pred_fallthru
          _
        // Predicated region
        $region21: #{tpu_custom_call.1} parent=11 // pred_check
          %p758 = pneg %p198
        $region22: #{tpu_custom_call.1} parent=11 // pred_check_branch
          %760 = sbr.rel (%p758) target = $region24
        $region23: #{tpu_custom_call.1} parent=11 // pred_region
          _
        $region24: #{tpu_custom_call.1} parent=11 // pred_fallthru
          _
        // Predicated region
        $region25: #{tpu_custom_call.1} parent=11 // pred_check
          %p761 = pneg %p219
        $region26: #{tpu_custom_call.1} parent=11 // pred_check_branch
          %763 = sbr.rel (%p761) target = $region28
        $region27: #{tpu_custom_call.1} parent=11 // pred_region
          _
        $region28: #{tpu_custom_call.1} parent=11 // pred_fallthru
          _
        // Predicated region
        $region29: #{tpu_custom_call.1} parent=11 // pred_check
          %p764 = pneg %p240
        $region30: #{tpu_custom_call.1} parent=11 // pred_check_branch
          %766 = sbr.rel (%p764) target = $region32
        $region31: #{tpu_custom_call.1} parent=11 // pred_region
          _
        $region32: #{tpu_custom_call.1} parent=11 // pred_fallthru
          _
        // Predicated region
        $region33: #{tpu_custom_call.1} parent=11 // pred_check
          %p767 = pneg %p261
        $region34: #{tpu_custom_call.1} parent=11 // pred_check_branch
          %769 = sbr.rel (%p767) target = $region36
        $region35: #{tpu_custom_call.1} parent=11 // pred_region
          _
        $region36: #{tpu_custom_call.1} parent=11 // pred_fallthru
          _
        // Predicated region
        $region37: #{tpu_custom_call.1} parent=11 // pred_check
          %p770 = pneg %p282
        $region38: #{tpu_custom_call.1} parent=11 // pred_check_branch
          %772 = sbr.rel (%p770) target = $region40
        $region39: #{tpu_custom_call.1} parent=11 // pred_region
          _
        $region40: #{tpu_custom_call.1} parent=11 // pred_fallthru
          _
        // Predicated region
        $region41: #{tpu_custom_call.1} parent=11 // pred_check
          %p773 = pneg %p303
        $region42: #{tpu_custom_call.1} parent=11 // pred_check_branch
          %775 = sbr.rel (%p773) target = $region44
        $region43: #{tpu_custom_call.1} parent=11 // pred_region
          _
        $region44: #{tpu_custom_call.1} parent=11 // pred_fallthru
          _
        // Predicated region
        $region45: #{tpu_custom_call.1} parent=11 // pred_check
          %p776 = pneg %p324
        $region46: #{tpu_custom_call.1} parent=11 // pred_check_branch
          %778 = sbr.rel (%p776) target = $region48
        $region47: #{tpu_custom_call.1} parent=11 // pred_region
          _
        $region48: #{tpu_custom_call.1} parent=11 // pred_fallthru
          _
        // Predicated region
        $region49: #{tpu_custom_call.1} parent=11 // pred_check
          %p779 = pneg %p345
        $region50: #{tpu_custom_call.1} parent=11 // pred_check_branch
          %781 = sbr.rel (%p779) target = $region52
        $region51: #{tpu_custom_call.1} parent=11 // pred_region
          _
        $region52: #{tpu_custom_call.1} parent=11 // pred_fallthru
          _
        // Predicated region
        $region53: #{tpu_custom_call.1} parent=11 // pred_check
          %p782 = pneg %p366
        $region54: #{tpu_custom_call.1} parent=11 // pred_check_branch
          %784 = sbr.rel (%p782) target = $region56
        $region55: #{tpu_custom_call.1} parent=11 // pred_region
          _
        $region56: #{tpu_custom_call.1} parent=11 // pred_fallthru
          _
        // Predicated region
        $region57: #{tpu_custom_call.1} parent=11 // pred_check
          %p785 = pneg %p387
        $region58: #{tpu_custom_call.1} parent=11 // pred_check_branch
          %787 = sbr.rel (%p785) target = $region60
        $region59: #{tpu_custom_call.1} parent=11 // pred_region
          _
        $region60: #{tpu_custom_call.1} parent=11 // pred_fallthru
          _
        // Predicated region
        $region61: #{tpu_custom_call.1} parent=11 // pred_check
          %p788 = pneg %p408
        $region62: #{tpu_custom_call.1} parent=11 // pred_check_branch
          %790 = sbr.rel (%p788) target = $region64
        $region63: #{tpu_custom_call.1} parent=11 // pred_region
          _
        $region64: #{tpu_custom_call.1} parent=11 // pred_fallthru
          _
        // Predicated region
        $region65: #{tpu_custom_call.1} parent=11 // pred_check
          %p791 = pneg %p429
        $region66: #{tpu_custom_call.1} parent=11 // pred_check_branch
          %793 = sbr.rel (%p791) target = $region68
        $region67: #{tpu_custom_call.1} parent=11 // pred_region
          _
        $region68: #{tpu_custom_call.1} parent=11 // pred_fallthru
          _
        // Predicated region
        $region69: #{tpu_custom_call.1} parent=11 // pred_check
          %p794 = pneg %p450
        $region70: #{tpu_custom_call.1} parent=11 // pred_check_branch
          %796 = sbr.rel (%p794) target = $region72
        $region71: #{tpu_custom_call.1} parent=11 // pred_region
          _
        $region72: #{tpu_custom_call.1} parent=11 // pred_fallthru
          _
        // Predicated region
        $region73: #{tpu_custom_call.1} parent=11 // pred_check
          %p797 = pneg %p471
        $region74: #{tpu_custom_call.1} parent=11 // pred_check_branch
          %799 = sbr.rel (%p797) target = $region76
        $region75: #{tpu_custom_call.1} parent=11 // pred_region
          _
        $region76: #{tpu_custom_call.1} parent=11 // pred_fallthru
          _
        // Predicated region
        $region77: #{tpu_custom_call.1} parent=11 // pred_check
          %p800 = pneg %p492
        $region78: #{tpu_custom_call.1} parent=11 // pred_check_branch
          %802 = sbr.rel (%p800) target = $region80
        $region79: #{tpu_custom_call.1} parent=11 // pred_region
          _
        $region80: #{tpu_custom_call.1} parent=11 // pred_fallthru
          _
        // Predicated region
        $region81: #{tpu_custom_call.1} parent=11 // pred_check
          %p803 = pneg %p513
        $region82: #{tpu_custom_call.1} parent=11 // pred_check_branch
          %805 = sbr.rel (%p803) target = $region84
        $region83: #{tpu_custom_call.1} parent=11 // pred_region
          _
        $region84: #{tpu_custom_call.1} parent=11 // pred_fallthru
          _
        // Predicated region
        $region85: #{tpu_custom_call.1} parent=11 // pred_check
          %p806 = pneg %p534
        $region86: #{tpu_custom_call.1} parent=11 // pred_check_branch
          %808 = sbr.rel (%p806) target = $region88
        $region87: #{tpu_custom_call.1} parent=11 // pred_region
          _
        $region88: #{tpu_custom_call.1} parent=11 // pred_fallthru
          _
        // Predicated region
        $region89: #{tpu_custom_call.1} parent=11 // pred_check
          %p809 = pneg %p555
        $region90: #{tpu_custom_call.1} parent=11 // pred_check_branch
          %811 = sbr.rel (%p809) target = $region92
        $region91: #{tpu_custom_call.1} parent=11 // pred_region
          _
        $region92: #{tpu_custom_call.1} parent=11 // pred_fallthru
          _
        // Predicated region
        $region93: #{tpu_custom_call.1} parent=11 // pred_check
          %p812 = pneg %p576
        $region94: #{tpu_custom_call.1} parent=11 // pred_check_branch
          %814 = sbr.rel (%p812) target = $region96
        $region95: #{tpu_custom_call.1} parent=11 // pred_region
          _
        $region96: #{tpu_custom_call.1} parent=11 // pred_fallthru
          _
        // Predicated region
        $region97: #{tpu_custom_call.1} parent=11 // pred_check
          %p815 = pneg %p597
        $region98: #{tpu_custom_call.1} parent=11 // pred_check_branch
          %817 = sbr.rel (%p815) target = $region100
        $region99: #{tpu_custom_call.1} parent=11 // pred_region
          _
        $region100: #{tpu_custom_call.1} parent=11 // pred_fallthru
          _
        // Predicated region
        $region101: #{tpu_custom_call.1} parent=11 // pred_check
          %p818 = pneg %p618
        $region102: #{tpu_custom_call.1} parent=11 // pred_check_branch
          %820 = sbr.rel (%p818) target = $region104
        $region103: #{tpu_custom_call.1} parent=11 // pred_region
          _
        $region104: #{tpu_custom_call.1} parent=11 // pred_fallthru
          _
        // Predicated region
        $region105: #{tpu_custom_call.1} parent=11 // pred_check
          %p821 = pneg %p639
        $region106: #{tpu_custom_call.1} parent=11 // pred_check_branch
          %823 = sbr.rel (%p821) target = $region108
        $region107: #{tpu_custom_call.1} parent=11 // pred_region
          _
        $region108: #{tpu_custom_call.1} parent=11 // pred_fallthru
          _
        // Predicated region
        $region109: #{tpu_custom_call.1} parent=11 // pred_check
          %p824 = pneg %p660
        $region110: #{tpu_custom_call.1} parent=11 // pred_check_branch
          %826 = sbr.rel (%p824) target = $region112
        $region111: #{tpu_custom_call.1} parent=11 // pred_region
          _
        $region112: #{tpu_custom_call.1} parent=11 // pred_fallthru
          _
        // Predicated region
        $region113: #{tpu_custom_call.1} parent=11 // pred_check
          %p827 = pneg %p681
        $region114: #{tpu_custom_call.1} parent=11 // pred_check_branch
          %829 = sbr.rel (%p827) target = $region116
        $region115: #{tpu_custom_call.1} parent=11 // pred_region
          _
        $region116: #{tpu_custom_call.1} parent=11 // pred_fallthru
          _
      $region12: #{tpu_custom_call.1} parent=5 // pred_fallthru
        _
      %p830 = scmp.lt.s32.totalorder %s69, 2
      // Predicated region
      $region117: #{tpu_custom_call.1} parent=5 // pred_check
        %p831 = pneg %p830
      $region118: #{tpu_custom_call.1} parent=5 // pred_check_branch
        %833 = sbr.rel (%p831) target = $region120
      $region119: #{tpu_custom_call.1} parent=5 // pred_region
        // Predicated region
        $region121: #{tpu_custom_call.1} parent=119 // pred_check
          %p834 = pneg %p101
        $region122: #{tpu_custom_call.1} parent=119 // pred_check_branch
          %836 = sbr.rel (%p834) target = $region124
        $region123: #{tpu_custom_call.1} parent=119 // pred_region
          %p837 = scmp.lt.s32.totalorder %s76, 1
          %s838 = scalar_select %p837, %s76, 1
          %s839 = smul.addr %s838, 8
          %s840 = scalar_lea.vmem %s1, %s839
        $region124: #{tpu_custom_call.1} parent=119 // pred_fallthru
          _
        // Predicated region
        $region125: #{tpu_custom_call.1} parent=119 // pred_check
          %p841 = pneg %p129
        $region126: #{tpu_custom_call.1} parent=119 // pred_check_branch
          %843 = sbr.rel (%p841) target = $region128
        $region127: #{tpu_custom_call.1} parent=119 // pred_region
          %s844 = smul.u32 8, %s77
          %p845 = scmp.lt.s32.totalorder %s76, 1
          %s846 = scalar_select %p845, %s76, 1
          %p847 = scmp.lt.s32.totalorder %s844, 7
          %s848 = scalar_select %p847, %s844, 7
          %s849 = smul.addr %s846, 8
          %s850 = sadd.s32 %s848, %s849
          %s851 = smul.addr %s850, 8
          %s852 = scalar_lea.vmem %s3, %s851
          %s853 = smul.u32 8, %s77
        $region128: #{tpu_custom_call.1} parent=119 // pred_fallthru
          _
      $region120: #{tpu_custom_call.1} parent=5 // pred_fallthru
        _
      %p854 = scmp.le.s32.totalorder 1, %s69
      %p855 = scmp.lt.s32.totalorder %s69, 3
      %p856 = pnand %p854, %p855
      %p857 = pneg %p856
      // Predicated region
      $region129: #{tpu_custom_call.1} parent=5 // pred_check
        _
      $region130: #{tpu_custom_call.1} parent=5 // pred_check_branch
        %859 = sbr.rel (%p856) target = $region132
      $region131: #{tpu_custom_call.1} parent=5 // pred_region
        %s860 = ssub.s32 %s69, 1
        %p861 = scmp.lt.s32.totalorder %s78, 1
        %s862 = scalar_select %p861, %s78, 1
        %s863 = smul.addr %s862, 8
        %s864 = scalar_lea.vmem %s1, %s863
        %p865 = pneg %p107
        %p866 = pneg %p104
        %s867 = smul.u32 8, %s79
        %p868 = scmp.lt.s32.totalorder %s78, 1
        %s869 = scalar_select %p868, %s78, 1
        %p870 = scmp.lt.s32.totalorder %s867, 7
        %s871 = scalar_select %p870, %s867, 7
        %s872 = smul.addr %s869, 8
        %s873 = sadd.s32 %s871, %s872
        %s874 = smul.addr %s873, 8
        %s875 = scalar_lea.vmem %s3, %s874
        %p876 = pneg %p135
        %p877 = pneg %p132
        %p878 = pneg %p156
        %p879 = pneg %p153
        %p880 = pneg %p177
        %p881 = pneg %p174
        %p882 = pneg %p198
        %p883 = pneg %p195
        %p884 = pneg %p219
        %p885 = pneg %p216
        %p886 = pneg %p240
        %p887 = pneg %p237
        %p888 = pneg %p261
        %p889 = pneg %p258
        %p890 = pneg %p282
        %p891 = pneg %p279
        %p892 = pneg %p303
        %p893 = pneg %p300
        %p894 = pneg %p324
        %p895 = pneg %p321
        %p896 = pneg %p345
        %p897 = pneg %p342
        %p898 = pneg %p366
        %p899 = pneg %p363
        %p900 = pneg %p387
        %p901 = pneg %p384
        %p902 = pneg %p408
        %p903 = pneg %p405
        %p904 = pneg %p429
        %p905 = pneg %p426
        %p906 = pneg %p450
        %p907 = pneg %p447
        %p908 = pneg %p471
        %p909 = pneg %p468
        %p910 = pneg %p492
        %p911 = pneg %p489
        %p912 = pneg %p513
        %p913 = pneg %p510
        %p914 = pneg %p534
        %p915 = pneg %p531
        %p916 = pneg %p555
        %p917 = pneg %p552
        %p918 = pneg %p576
        %p919 = pneg %p573
        %p920 = pneg %p597
        %p921 = pneg %p594
        %p922 = pneg %p618
        %p923 = pneg %p615
        %p924 = pneg %p639
        %p925 = pneg %p636
        %p926 = pneg %p660
        %p927 = pneg %p657
        %p928 = pneg %p681
        %p929 = pneg %p678
        %p930 = pneg %p709
        %p931 = pneg %p706
        %s932 = sand.u32 %s696, 1
        %s933 = scalar_lea.sflag [#allocation7], %s932
        %s934 = sand.u32 %s696, 1
        %s935 = smul.addr %s934, 8
        %s936 = scalar_lea.vmem [#allocation6], %s935
        %p937 = pneg %p737
        %p938 = pneg %p734
        %s939 = smul.u32 8, %s79
        %p940 = scmp.lt.s32.totalorder %s78, 1
        %s941 = scalar_select %p940, %s78, 1
        %p942 = scmp.lt.s32.totalorder %s939, 7
        %s943 = scalar_select %p942, %s939, 7
        %s944 = smul.addr %s941, 8
        %s945 = sadd.s32 %s943, %s944
        %s946 = smul.addr %s945, 8
        %s947 = scalar_lea.vmem %s59, %s946
        %p948 = scmp.lt.s32.totalorder %s78, 1
        %s949 = scalar_select %p948, %s78, 1
        %s950 = smul.addr %s949, 8
        %s951 = scalar_lea.vmem %s1, %s950
        %s952 = smul.u32 8, %s79
        %p953 = scmp.lt.s32.totalorder %s78, 1
        %s954 = scalar_select %p953, %s78, 1
        %p955 = scmp.lt.s32.totalorder %s952, 7
        %s956 = scalar_select %p955, %s952, 7
        %s957 = smul.addr %s954, 8
        %s958 = sadd.s32 %s956, %s957
        %s959 = smul.addr %s958, 8
        %s960 = scalar_lea.vmem %s3, %s959
        %s961 = smul.u32 8, %s79
        %s962 = smul.u32 8, %s79
        %p963 = scmp.lt.s32.totalorder %s78, 1
        %s964 = scalar_select %p963, %s78, 1
        %p965 = scmp.lt.s32.totalorder %s962, 7
        %s966 = scalar_select %p965, %s962, 7
        %s967 = smul.addr %s964, 8
        %s968 = sadd.s32 %s966, %s967
        %s969 = smul.addr %s968, 8
        %s970 = scalar_lea.vmem %s59, %s969
        %s971 = smul.u32 8, %s79
        %p972 = scmp.eq.s32.totalorder %s79, 0
        // Predicated region
        $region133: #{tpu_custom_call.1} parent=131 // pred_check
          %p973 = pneg %p972
        $region134: #{tpu_custom_call.1} parent=131 // pred_check_branch
          %975 = sbr.rel (%p973) target = $region136
        $region135: #{tpu_custom_call.1} parent=131 // pred_region
          %v976 = vld [vmem:[%s951] sm:$0xff]
          %v977 = vld [vmem:[%s5] sm:$0x1]
          %v978 = vld [vmem:[%s7] sm:$0x1]
          %vm979 = vcmask 261120
          %v980 = vsel %vm979, %v976, 0.0
          %981 = vadd.xlane.f32.xlu0 %v980
          %v982 = vpop.xlane.xlu0 %981
          %v983 = vrcp.pop 32.0
          %v984 = vmul.f32 32.0, %v983
          %v985 = vsub.f32 1.0, %v984
          %v986 = vmul.f32 %v983, %v985
          %v987 = vadd.f32 %v983, %v986
          %vm988 = vweird.f32 %v983
          %v989 = vsel %vm988, %v983, %v987
          %v990 = vmul.f32 %v982, %v989
          %v991 = vmul.f32 %v976, %v976
          %v992 = vsel %vm979, %v991, 0.0
          %993 = vadd.xlane.f32.xlu0 %v992
          %v994 = vpop.xlane.xlu0 %993
          %v995 = vmul.f32 %v994, %v989
          %v996 = vmul.f32 %v990, %v990
          %v997 = vsub.f32 %v995, %v996
          %v998 = vmax.f32 %v997, 0.0
          %v999 = vsub.f32 %v976, %v990
          %v1000 = vadd.f32 %v998, 1e-05
          %v1001 = vrsqrt.pop %v1000
          %v1002 = vmul.f32 %v1001, %v1000
          %v1003 = vmul.f32 %v1002, %v1001
          %v1004 = vmul.f32 0.5, %v1003
          %v1005 = vsub.f32 1.5, %v1004
          %v1006 = vmul.f32 %v1001, %v1005
          %vm1007 = vweird.f32 %v1000
          %vm1008 = vweird.f32 %v1001
          %vm1009 = vmor %vm1007, %vm1008
          %v1010 = vsel %vm1009, %v1001, %v1006
          %v1011 = vmul.f32 %v999, %v1010
          %v1013 = vperm.slane %v977, 0
          %v1015 = vmul.f32 %v1011, %v1013
          %v1017 = vperm.slane %v978, 0
          %v1019 = vadd.f32 %v1015, %v1017
          %v1020 = vld [vmem:[%s9] sm:$0xff]
          %v1021 = vld [vmem:[%s9 + $0x8] sm:$0xff]
          %v1022 = vld [vmem:[%s9 + $0x10] sm:$0xff]
          %v1023 = vld [vmem:[%s9 + $0x18] sm:$0xff]
          %v1024 = vld [vmem:[%s11] sm:$0x1]
          %v1026 = vperm.slane %v1024, 0
          %v1029 = vsel %vm979, %v1019, 0
          %1031 = vmatpush.msra.mxu0 0.0
          %1032 = vmatpush.msra.mxu0 0.0
          %1033 = vmatpush.msra.mxu0 0.0
          %1034 = vmatpush.msra.mxu0 0.0
          %1035 = vmatpush.msra.mxu0 0.0
          %1036 = vmatpush.msra.mxu0 0.0
          %1037 = vmatpush.msra.mxu0 0.0
          %1038 = vmatpush.msra.mxu0 0.0
          %1039 = vmatpush.msra.mxu0 0.0
          %1040 = vmatpush.msra.mxu0 0.0
          %1041 = vmatpush.msra.mxu0 0.0
          %1042 = vmatpush.msra.mxu0 0.0
          %1043 = vmatpush.msra.mxu0 %v1023
          %1044 = vmatpush.msra.mxu0 %v1022
          %1045 = vmatpush.msra.mxu0 %v1021
          %1046 = vmatpush.msra.mxu0 %v1020
          %1047 = vmatmul.f32.gmra.mxu0 %v1029
          %v1048 = vpop.f32.mrf.mxu0
          %v1049 = vadd.f32 %v1026, %v1048
          %1050 = vdwg.mxu0
          %1051 = vst.msk [vmem:[#allocation2] sm:$0xff] %vm979, %v1019
          %1052 = vst.msk [vmem:[#allocation3] sm:$0xff] %vm979, %v1049
          %1054 = vrot.lane.b32.xlu0 %v1049, 96
          %v1055 = vpop.permute.xlu0 %1054
          %1057 = vst.msk [vmem:[#allocation4] sm:$0xff] %vm979, %v1055
          %1058 = vrot.lane.b32.xlu0 %v1049, 64
          %v1059 = vpop.permute.xlu0 %1058
          %1061 = vst.msk [vmem:[#allocation5] sm:$0xff] %vm979, %v1059
        $region136: #{tpu_custom_call.1} parent=131 // pred_fallthru
          _
        %s1062 = smul.u32 %s79, 8
        %s1063 = scalar_lea.vmem [#allocation2], %s1062
        %v1064 = vld [vmem:[%s1063] sm:$0xff]
        %s1065 = scalar_lea.vmem [#allocation3], %s1062
        %v1066 = vld [vmem:[%s1065] sm:$0xff]
        %v1068 = vrot.slane %v1066, 1
        %v1069 = vrot.slane %v1066, 2
        %v1070 = vrot.slane %v1066, 3
        %v1071 = vrot.slane %v1066, 4
        %v1072 = vrot.slane %v1066, 5
        %v1073 = vrot.slane %v1066, 6
        %v1074 = vrot.slane %v1066, 7
        %v1075 = vld [vmem:[#allocation4] sm:$0xff]
        %v1076 = vld [vmem:[#allocation5] sm:$0xff]
        %v1077 = vld [vmem:[%s960] sm:$0xff]
        %v1078 = vld [vmem:[%s960 + $0x8] sm:$0xff]
        %v1079 = vld [vmem:[%s960 + $0x10] sm:$0xff]
        %v1080 = vld [vmem:[%s960 + $0x18] sm:$0xff]
        %v1081 = vld [vmem:[%s960 + $0x20] sm:$0xff]
        %v1082 = vld [vmem:[%s960 + $0x28] sm:$0xff]
        %v1083 = vld [vmem:[%s960 + $0x30] sm:$0xff]
        %v1084 = vld [vmem:[%s960 + $0x38] sm:$0xff]
        %v1085 = vld [vmem:[%s13] sm:$0xff]
        %v1086 = vld [vmem:[%s13 + $0x8] sm:$0xff]
        %v1087 = vld [vmem:[%s13 + $0x10] sm:$0xff]
        %v1088 = vld [vmem:[%s13 + $0x18] sm:$0xff]
        %v1089 = vld [vmem:[%s15] sm:$0x1]
        %v1091 = vperm.slane %v1089, 0
        %vm1093 = vcmask 261120
        %v1095 = vsel %vm1093, %v1077, 0
        %v1098 = vsel %vm1093, %v1078, 0
        %v1101 = vsel %vm1093, %v1079, 0
        %v1104 = vsel %vm1093, %v1080, 0
        %v1107 = vsel %vm1093, %v1081, 0
        %v1110 = vsel %vm1093, %v1082, 0
        %v1113 = vsel %vm1093, %v1083, 0
        %v1116 = vsel %vm1093, %v1084, 0
        %1118 = vmatpush.msra.mxu0 0.0
        %1119 = vmatpush.msra.mxu0 0.0
        %1120 = vmatpush.msra.mxu0 0.0
        %1121 = vmatpush.msra.mxu0 0.0
        %1122 = vmatpush.msra.mxu0 0.0
        %1123 = vmatpush.msra.mxu0 0.0
        %1124 = vmatpush.msra.mxu0 0.0
        %1125 = vmatpush.msra.mxu0 0.0
        %1126 = vmatpush.msra.mxu0 0.0
        %1127 = vmatpush.msra.mxu0 0.0
        %1128 = vmatpush.msra.mxu0 0.0
        %1129 = vmatpush.msra.mxu0 0.0
        %1130 = vmatpush.msra.mxu0 %v1088
        %1131 = vmatpush.msra.mxu0 %v1087
        %1132 = vmatpush.msra.mxu0 %v1086
        %1133 = vmatpush.msra.mxu0 %v1085
        %1134 = vmatmul.f32.gmra.mxu0 %v1095
        %v1135 = vpop.f32.mrf.mxu0
        %v1136 = vadd.f32 %v1091, %v1135
        %1137 = vmatmul.f32.gmra.mxu0 %v1098
        %v1138 = vpop.f32.mrf.mxu0
        %v1139 = vadd.f32 %v1091, %v1138
        %1140 = vmatmul.f32.gmra.mxu0 %v1101
        %v1141 = vpop.f32.mrf.mxu0
        %v1142 = vadd.f32 %v1091, %v1141
        %1143 = vmatmul.f32.gmra.mxu0 %v1104
        %v1144 = vpop.f32.mrf.mxu0
        %v1145 = vadd.f32 %v1091, %v1144
        %1146 = vmatmul.f32.gmra.mxu0 %v1107
        %v1147 = vpop.f32.mrf.mxu0
        %v1148 = vadd.f32 %v1091, %v1147
        %1149 = vmatmul.f32.gmra.mxu0 %v1110
        %v1150 = vpop.f32.mrf.mxu0
        %v1151 = vadd.f32 %v1091, %v1150
        %1152 = vmatmul.f32.gmra.mxu0 %v1113
        %v1153 = vpop.f32.mrf.mxu0
        %v1154 = vadd.f32 %v1091, %v1153
        %1155 = vmatmul.f32.gmra.mxu0 %v1116
        %v1156 = vpop.f32.mrf.mxu0
        %v1157 = vadd.f32 %v1091, %v1156
        %1158 = vdwg.mxu0
        %v1159 = vperm.slane %v1066, 0
        %v1160 = vperm.slane %v1068, 0
        %v1161 = vperm.slane %v1069, 0
        %v1162 = vperm.slane %v1070, 0
        %v1163 = vperm.slane %v1071, 0
        %v1164 = vperm.slane %v1072, 0
        %v1165 = vperm.slane %v1073, 0
        %v1166 = vperm.slane %v1074, 0
        %v1175 = vmul.f32 %v1159, %v1075
        %v1176 = vmul.f32 %v1160, %v1075
        %v1177 = vmul.f32 %v1161, %v1075
        %v1178 = vmul.f32 %v1162, %v1075
        %v1179 = vmul.f32 %v1163, %v1075
        %v1180 = vmul.f32 %v1164, %v1075
        %v1181 = vmul.f32 %v1165, %v1075
        %v1182 = vmul.f32 %v1166, %v1075
        %v1183 = vadd.f32 %v1136, 1.0
        %v1184 = vadd.f32 %v1139, 1.0
        %v1185 = vadd.f32 %v1142, 1.0
        %v1186 = vadd.f32 %v1145, 1.0
        %v1187 = vadd.f32 %v1148, 1.0
        %v1188 = vadd.f32 %v1151, 1.0
        %v1189 = vadd.f32 %v1154, 1.0
        %v1190 = vadd.f32 %v1157, 1.0
        %v1191 = vmul.f32 %v1175, %v1183
        %v1192 = vmul.f32 %v1176, %v1184
        %v1193 = vmul.f32 %v1177, %v1185
        %v1194 = vmul.f32 %v1178, %v1186
        %v1195 = vmul.f32 %v1179, %v1187
        %v1196 = vmul.f32 %v1180, %v1188
        %v1197 = vmul.f32 %v1181, %v1189
        %v1198 = vmul.f32 %v1182, %v1190
        %v1199 = vmul.f32 %v1191, %v1136
        %v1200 = vmul.f32 %v1192, %v1139
        %v1201 = vmul.f32 %v1193, %v1142
        %v1202 = vmul.f32 %v1194, %v1145
        %v1203 = vmul.f32 %v1195, %v1148
        %v1204 = vmul.f32 %v1196, %v1151
        %v1205 = vmul.f32 %v1197, %v1154
        %v1206 = vmul.f32 %v1198, %v1157
        %v1207 = vld [vmem:[%s17] sm:$0xff]
        %v1208 = vld [vmem:[%s17 + $0x8] sm:$0xff]
        %v1209 = vld [vmem:[%s17 + $0x10] sm:$0xff]
        %v1210 = vld [vmem:[%s17 + $0x18] sm:$0xff]
        %v1211 = vld [vmem:[%s19] sm:$0x1]
        %v1213 = vperm.slane %v1211, 0
        %v1216 = vsel %vm1093, %v1199, 0
        %v1219 = vsel %vm1093, %v1200, 0
        %v1222 = vsel %vm1093, %v1201, 0
        %v1225 = vsel %vm1093, %v1202, 0
        %v1228 = vsel %vm1093, %v1203, 0
        %v1231 = vsel %vm1093, %v1204, 0
        %v1234 = vsel %vm1093, %v1205, 0
        %v1237 = vsel %vm1093, %v1206, 0
        %1239 = vmatpush.msra.mxu0 0.0
        %1240 = vmatpush.msra.mxu0 0.0
        %1241 = vmatpush.msra.mxu0 0.0
        %1242 = vmatpush.msra.mxu0 0.0
        %1243 = vmatpush.msra.mxu0 0.0
        %1244 = vmatpush.msra.mxu0 0.0
        %1245 = vmatpush.msra.mxu0 0.0
        %1246 = vmatpush.msra.mxu0 0.0
        %1247 = vmatpush.msra.mxu0 0.0
        %1248 = vmatpush.msra.mxu0 0.0
        %1249 = vmatpush.msra.mxu0 0.0
        %1250 = vmatpush.msra.mxu0 0.0
        %1251 = vmatpush.msra.mxu0 %v1210
        %1252 = vmatpush.msra.mxu0 %v1209
        %1253 = vmatpush.msra.mxu0 %v1208
        %1254 = vmatpush.msra.mxu0 %v1207
        %1255 = vmatmul.f32.gmra.mxu0 %v1216
        %v1256 = vpop.f32.mrf.mxu0
        %v1257 = vadd.f32 %v1213, %v1256
        %1258 = vmatmul.f32.gmra.mxu0 %v1219
        %v1259 = vpop.f32.mrf.mxu0
        %v1260 = vadd.f32 %v1213, %v1259
        %1261 = vmatmul.f32.gmra.mxu0 %v1222
        %v1262 = vpop.f32.mrf.mxu0
        %v1263 = vadd.f32 %v1213, %v1262
        %1264 = vmatmul.f32.gmra.mxu0 %v1225
        %v1265 = vpop.f32.mrf.mxu0
        %v1266 = vadd.f32 %v1213, %v1265
        %1267 = vmatmul.f32.gmra.mxu0 %v1228
        %v1268 = vpop.f32.mrf.mxu0
        %v1269 = vadd.f32 %v1213, %v1268
        %1270 = vmatmul.f32.gmra.mxu0 %v1231
        %v1271 = vpop.f32.mrf.mxu0
        %v1272 = vadd.f32 %v1213, %v1271
        %1273 = vmatmul.f32.gmra.mxu0 %v1234
        %v1274 = vpop.f32.mrf.mxu0
        %v1275 = vadd.f32 %v1213, %v1274
        %1276 = vmatmul.f32.gmra.mxu0 %v1237
        %v1277 = vpop.f32.mrf.mxu0
        %v1278 = vadd.f32 %v1213, %v1277
        %1279 = vdwg.mxu0
        %v1280 = vsel %vm1093, %v1199, -inf
        %v1281 = vrot.slane %v1280, 4
        %v1282 = vmax.f32 %v1280, %v1281
        %v1283 = vrot.slane %v1282, 2
        %v1284 = vmax.f32 %v1282, %v1283
        %v1285 = vrot.slane %v1284, 1
        %v1286 = vmax.f32 %v1284, %v1285
        %v1287 = vsel %vm1093, %v1200, -inf
        %v1288 = vrot.slane %v1287, 4
        %v1289 = vmax.f32 %v1287, %v1288
        %v1290 = vrot.slane %v1289, 2
        %v1291 = vmax.f32 %v1289, %v1290
        %v1292 = vrot.slane %v1291, 1
        %v1293 = vmax.f32 %v1291, %v1292
        %v1294 = vsel %vm1093, %v1201, -inf
        %v1295 = vrot.slane %v1294, 4
        %v1296 = vmax.f32 %v1294, %v1295
        %v1297 = vrot.slane %v1296, 2
        %v1298 = vmax.f32 %v1296, %v1297
        %v1299 = vrot.slane %v1298, 1
        %v1300 = vmax.f32 %v1298, %v1299
        %v1301 = vsel %vm1093, %v1202, -inf
        %v1302 = vrot.slane %v1301, 4
        %v1303 = vmax.f32 %v1301, %v1302
        %v1304 = vrot.slane %v1303, 2
        %v1305 = vmax.f32 %v1303, %v1304
        %v1306 = vrot.slane %v1305, 1
        %v1307 = vmax.f32 %v1305, %v1306
        %v1308 = vsel %vm1093, %v1203, -inf
        %v1309 = vrot.slane %v1308, 4
        %v1310 = vmax.f32 %v1308, %v1309
        %v1311 = vrot.slane %v1310, 2
        %v1312 = vmax.f32 %v1310, %v1311
        %v1313 = vrot.slane %v1312, 1
        %v1314 = vmax.f32 %v1312, %v1313
        %v1315 = vsel %vm1093, %v1204, -inf
        %v1316 = vrot.slane %v1315, 4
        %v1317 = vmax.f32 %v1315, %v1316
        %v1318 = vrot.slane %v1317, 2
        %v1319 = vmax.f32 %v1317, %v1318
        %v1320 = vrot.slane %v1319, 1
        %v1321 = vmax.f32 %v1319, %v1320
        %v1322 = vsel %vm1093, %v1205, -inf
        %v1323 = vrot.slane %v1322, 4
        %v1324 = vmax.f32 %v1322, %v1323
        %v1325 = vrot.slane %v1324, 2
        %v1326 = vmax.f32 %v1324, %v1325
        %v1327 = vrot.slane %v1326, 1
        %v1328 = vmax.f32 %v1326, %v1327
        %v1329 = vsel %vm1093, %v1206, -inf
        %v1330 = vrot.slane %v1329, 4
        %v1331 = vmax.f32 %v1329, %v1330
        %v1332 = vrot.slane %v1331, 2
        %v1333 = vmax.f32 %v1331, %v1332
        %v1334 = vrot.slane %v1333, 1
        %v1335 = vmax.f32 %v1333, %v1334
        %v1336 = vsub.f32 %v1199, %v1286
        %v1337 = vsub.f32 %v1200, %v1293
        %v1338 = vsub.f32 %v1201, %v1300
        %v1339 = vsub.f32 %v1202, %v1307
        %v1340 = vsub.f32 %v1203, %v1314
        %v1341 = vsub.f32 %v1204, %v1321
        %v1342 = vsub.f32 %v1205, %v1328
        %v1343 = vsub.f32 %v1206, %v1335
        %v1344 = vmul.f32 %v1336, 1.442695
        %v1345 = vpow.pop %v1344
        %v1346 = vmul.f32 %v1337, 1.442695
        %v1347 = vpow.pop %v1346
        %v1348 = vmul.f32 %v1338, 1.442695
        %v1349 = vpow.pop %v1348
        %v1350 = vmul.f32 %v1339, 1.442695
        %v1351 = vpow.pop %v1350
        %v1352 = vmul.f32 %v1340, 1.442695
        %v1353 = vpow.pop %v1352
        %v1354 = vmul.f32 %v1341, 1.442695
        %v1355 = vpow.pop %v1354
        %v1356 = vmul.f32 %v1342, 1.442695
        %v1357 = vpow.pop %v1356
        %v1358 = vmul.f32 %v1343, 1.442695
        %v1359 = vpow.pop %v1358
        %v1360 = vsel %vm1093, %v1345, 0.0
        %v1361 = vrot.slane %v1360, 4
        %v1362 = vadd.f32 %v1360, %v1361
        %v1363 = vrot.slane %v1362, 2
        %v1364 = vadd.f32 %v1362, %v1363
        %v1365 = vrot.slane %v1364, 1
        %v1366 = vadd.f32 %v1364, %v1365
        %v1367 = vsel %vm1093, %v1347, 0.0
        %v1368 = vrot.slane %v1367, 4
        %v1369 = vadd.f32 %v1367, %v1368
        %v1370 = vrot.slane %v1369, 2
        %v1371 = vadd.f32 %v1369, %v1370
        %v1372 = vrot.slane %v1371, 1
        %v1373 = vadd.f32 %v1371, %v1372
        %v1374 = vsel %vm1093, %v1349, 0.0
        %v1375 = vrot.slane %v1374, 4
        %v1376 = vadd.f32 %v1374, %v1375
        %v1377 = vrot.slane %v1376, 2
        %v1378 = vadd.f32 %v1376, %v1377
        %v1379 = vrot.slane %v1378, 1
        %v1380 = vadd.f32 %v1378, %v1379
        %v1381 = vsel %vm1093, %v1351, 0.0
        %v1382 = vrot.slane %v1381, 4
        %v1383 = vadd.f32 %v1381, %v1382
        %v1384 = vrot.slane %v1383, 2
        %v1385 = vadd.f32 %v1383, %v1384
        %v1386 = vrot.slane %v1385, 1
        %v1387 = vadd.f32 %v1385, %v1386
        %v1388 = vsel %vm1093, %v1353, 0.0
        %v1389 = vrot.slane %v1388, 4
        %v1390 = vadd.f32 %v1388, %v1389
        %v1391 = vrot.slane %v1390, 2
        %v1392 = vadd.f32 %v1390, %v1391
        %v1393 = vrot.slane %v1392, 1
        %v1394 = vadd.f32 %v1392, %v1393
        %v1395 = vsel %vm1093, %v1355, 0.0
        %v1396 = vrot.slane %v1395, 4
        %v1397 = vadd.f32 %v1395, %v1396
        %v1398 = vrot.slane %v1397, 2
        %v1399 = vadd.f32 %v1397, %v1398
        %v1400 = vrot.slane %v1399, 1
        %v1401 = vadd.f32 %v1399, %v1400
        %v1402 = vsel %vm1093, %v1357, 0.0
        %v1403 = vrot.slane %v1402, 4
        %v1404 = vadd.f32 %v1402, %v1403
        %v1405 = vrot.slane %v1404, 2
        %v1406 = vadd.f32 %v1404, %v1405
        %v1407 = vrot.slane %v1406, 1
        %v1408 = vadd.f32 %v1406, %v1407
        %v1409 = vsel %vm1093, %v1359, 0.0
        %v1410 = vrot.slane %v1409, 4
        %v1411 = vadd.f32 %v1409, %v1410
        %v1412 = vrot.slane %v1411, 2
        %v1413 = vadd.f32 %v1411, %v1412
        %v1414 = vrot.slane %v1413, 1
        %v1415 = vadd.f32 %v1413, %v1414
        %v1416 = vrcp.pop %v1366
        %v1417 = vrcp.pop %v1373
        %v1418 = vrcp.pop %v1380
        %v1419 = vrcp.pop %v1387
        %v1420 = vrcp.pop %v1394
        %v1421 = vrcp.pop %v1401
        %v1422 = vrcp.pop %v1408
        %v1423 = vrcp.pop %v1415
        %v1424 = vmul.f32 %v1345, %v1416
        %v1425 = vmul.f32 %v1347, %v1417
        %v1426 = vmul.f32 %v1349, %v1418
        %v1427 = vmul.f32 %v1351, %v1419
        %v1428 = vmul.f32 %v1353, %v1420
        %v1429 = vmul.f32 %v1355, %v1421
        %v1430 = vmul.f32 %v1357, %v1422
        %v1431 = vmul.f32 %v1359, %v1423
        %v1432 = vmul.f32 %v1424, %v1076
        %v1433 = vmul.f32 %v1425, %v1076
        %v1434 = vmul.f32 %v1426, %v1076
        %v1435 = vmul.f32 %v1427, %v1076
        %v1436 = vmul.f32 %v1428, %v1076
        %v1437 = vmul.f32 %v1429, %v1076
        %v1438 = vmul.f32 %v1430, %v1076
        %v1439 = vmul.f32 %v1431, %v1076
        %v1440 = vsel %vm1093, %v1432, 0.0
        %v1441 = vrot.slane %v1440, 4
        %v1442 = vadd.f32 %v1440, %v1441
        %v1443 = vrot.slane %v1442, 2
        %v1444 = vadd.f32 %v1442, %v1443
        %v1445 = vrot.slane %v1444, 1
        %v1446 = vadd.f32 %v1444, %v1445
        %v1447 = vsel %vm1093, %v1433, 0.0
        %v1448 = vrot.slane %v1447, 4
        %v1449 = vadd.f32 %v1447, %v1448
        %v1450 = vrot.slane %v1449, 2
        %v1451 = vadd.f32 %v1449, %v1450
        %v1452 = vrot.slane %v1451, 1
        %v1453 = vadd.f32 %v1451, %v1452
        %v1454 = vsel %vm1093, %v1434, 0.0
        %v1455 = vrot.slane %v1454, 4
        %v1456 = vadd.f32 %v1454, %v1455
        %v1457 = vrot.slane %v1456, 2
        %v1458 = vadd.f32 %v1456, %v1457
        %v1459 = vrot.slane %v1458, 1
        %v1460 = vadd.f32 %v1458, %v1459
        %v1461 = vsel %vm1093, %v1435, 0.0
        %v1462 = vrot.slane %v1461, 4
        %v1463 = vadd.f32 %v1461, %v1462
        %v1464 = vrot.slane %v1463, 2
        %v1465 = vadd.f32 %v1463, %v1464
        %v1466 = vrot.slane %v1465, 1
        %v1467 = vadd.f32 %v1465, %v1466
        %v1468 = vsel %vm1093, %v1436, 0.0
        %v1469 = vrot.slane %v1468, 4
        %v1470 = vadd.f32 %v1468, %v1469
        %v1471 = vrot.slane %v1470, 2
        %v1472 = vadd.f32 %v1470, %v1471
        %v1473 = vrot.slane %v1472, 1
        %v1474 = vadd.f32 %v1472, %v1473
        %v1475 = vsel %vm1093, %v1437, 0.0
        %v1476 = vrot.slane %v1475, 4
        %v1477 = vadd.f32 %v1475, %v1476
        %v1478 = vrot.slane %v1477, 2
        %v1479 = vadd.f32 %v1477, %v1478
        %v1480 = vrot.slane %v1479, 1
        %v1481 = vadd.f32 %v1479, %v1480
        %v1482 = vsel %vm1093, %v1438, 0.0
        %v1483 = vrot.slane %v1482, 4
        %v1484 = vadd.f32 %v1482, %v1483
        %v1485 = vrot.slane %v1484, 2
        %v1486 = vadd.f32 %v1484, %v1485
        %v1487 = vrot.slane %v1486, 1
        %v1488 = vadd.f32 %v1486, %v1487
        %v1489 = vsel %vm1093, %v1439, 0.0
        %v1490 = vrot.slane %v1489, 4
        %v1491 = vadd.f32 %v1489, %v1490
        %v1492 = vrot.slane %v1491, 2
        %v1493 = vadd.f32 %v1491, %v1492
        %v1494 = vrot.slane %v1493, 1
        %v1495 = vadd.f32 %v1493, %v1494
        %v1496 = vld [vmem:[%s21] sm:$0xff]
        %v1497 = vld [vmem:[%s21 + $0x8] sm:$0xff]
        %v1498 = vld [vmem:[%s21 + $0x10] sm:$0xff]
        %v1499 = vld [vmem:[%s21 + $0x18] sm:$0xff]
        %v1500 = vld [vmem:[%s23] sm:$0x1]
        %v1502 = vperm.slane %v1500, 0
        %vm1512 = vcmask 1041409
        %v1513 = vsel %vm1512, %v1453, %v1446
        %vm1514 = vcmask 1042434
        %v1515 = vsel %vm1514, %v1460, %v1513
        %vm1516 = vcmask 1043459
        %v1517 = vsel %vm1516, %v1467, %v1515
        %vm1518 = vcmask 1044484
        %v1519 = vsel %vm1518, %v1474, %v1517
        %vm1520 = vcmask 1045509
        %v1521 = vsel %vm1520, %v1481, %v1519
        %vm1522 = vcmask 1046534
        %v1523 = vsel %vm1522, %v1488, %v1521
        %vm1524 = vcmask 1047559
        %v1525 = vsel %vm1524, %v1495, %v1523
        %v1526 = vsel %vm1093, %v1525, 0
        %1528 = vmatpush.msra.mxu0 0.0
        %1529 = vmatpush.msra.mxu0 0.0
        %1530 = vmatpush.msra.mxu0 0.0
        %1531 = vmatpush.msra.mxu0 0.0
        %1532 = vmatpush.msra.mxu0 0.0
        %1533 = vmatpush.msra.mxu0 0.0
        %1534 = vmatpush.msra.mxu0 0.0
        %1535 = vmatpush.msra.mxu0 0.0
        %1536 = vmatpush.msra.mxu0 0.0
        %1537 = vmatpush.msra.mxu0 0.0
        %1538 = vmatpush.msra.mxu0 0.0
        %1539 = vmatpush.msra.mxu0 0.0
        %1540 = vmatpush.msra.mxu0 %v1499
        %1541 = vmatpush.msra.mxu0 %v1498
        %1542 = vmatpush.msra.mxu0 %v1497
        %1543 = vmatpush.msra.mxu0 %v1496
        %1544 = vmatmul.f32.gmra.mxu0 %v1526
        %v1545 = vpop.f32.mrf.mxu0
        %v1546 = vadd.f32 %v1502, %v1545
        %1547 = vdwg.mxu0
        %v1548 = vadd.f32 %v1064, %v1546
        %v1549 = vld [vmem:[%s25] sm:$0x1]
        %v1550 = vld [vmem:[%s27] sm:$0x1]
        %v1551 = vsel %vm1093, %v1548, 0.0
        %1552 = vadd.xlane.f32.xlu0 %v1551
        %v1553 = vpop.xlane.xlu0 %1552
        %v1554 = vrcp.pop 32.0
        %v1555 = vmul.f32 32.0, %v1554
        %v1556 = vsub.f32 1.0, %v1555
        %v1557 = vmul.f32 %v1554, %v1556
        %v1558 = vadd.f32 %v1554, %v1557
        %vm1559 = vweird.f32 %v1554
        %v1560 = vsel %vm1559, %v1554, %v1558
        %v1561 = vmul.f32 %v1553, %v1560
        %v1562 = vmul.f32 %v1548, %v1548
        %v1563 = vsel %vm1093, %v1562, 0.0
        %1564 = vadd.xlane.f32.xlu0 %v1563
        %v1565 = vpop.xlane.xlu0 %1564
        %v1566 = vmul.f32 %v1565, %v1560
        %v1567 = vmul.f32 %v1561, %v1561
        %v1568 = vsub.f32 %v1566, %v1567
        %v1569 = vmax.f32 %v1568, 0.0
        %v1570 = vsub.f32 %v1548, %v1561
        %v1571 = vadd.f32 %v1569, 1e-05
        %v1572 = vrsqrt.pop %v1571
        %v1573 = vmul.f32 %v1572, %v1571
        %v1574 = vmul.f32 %v1573, %v1572
        %v1575 = vmul.f32 0.5, %v1574
        %v1576 = vsub.f32 1.5, %v1575
        %v1577 = vmul.f32 %v1572, %v1576
        %vm1578 = vweird.f32 %v1571
        %vm1579 = vweird.f32 %v1572
        %vm1580 = vmor %vm1578, %vm1579
        %v1581 = vsel %vm1580, %v1572, %v1577
        %v1582 = vmul.f32 %v1570, %v1581
        %v1584 = vperm.slane %v1549, 0
        %v1586 = vmul.f32 %v1582, %v1584
        %v1588 = vperm.slane %v1550, 0
        %v1590 = vadd.f32 %v1586, %v1588
        %v1591 = vadd.f32 %v1077, %v1257
        %v1592 = vadd.f32 %v1078, %v1260
        %v1593 = vadd.f32 %v1079, %v1263
        %v1594 = vadd.f32 %v1080, %v1266
        %v1595 = vadd.f32 %v1081, %v1269
        %v1596 = vadd.f32 %v1082, %v1272
        %v1597 = vadd.f32 %v1083, %v1275
        %v1598 = vadd.f32 %v1084, %v1278
        %v1599 = vld [vmem:[%s29] sm:$0x1]
        %v1600 = vld [vmem:[%s31] sm:$0x1]
        %v1601 = vsel %vm1093, %v1591, 0.0
        %1602 = vadd.xlane.f32.xlu0 %v1601
        %v1603 = vpop.xlane.xlu0 %1602
        %v1604 = vsel %vm1093, %v1592, 0.0
        %1605 = vadd.xlane.f32.xlu0 %v1604
        %v1606 = vpop.xlane.xlu0 %1605
        %v1607 = vsel %vm1093, %v1593, 0.0
        %1608 = vadd.xlane.f32.xlu0 %v1607
        %v1609 = vpop.xlane.xlu0 %1608
        %v1610 = vsel %vm1093, %v1594, 0.0
        %1611 = vadd.xlane.f32.xlu0 %v1610
        %v1612 = vpop.xlane.xlu0 %1611
        %v1613 = vsel %vm1093, %v1595, 0.0
        %1614 = vadd.xlane.f32.xlu0 %v1613
        %v1615 = vpop.xlane.xlu0 %1614
        %v1616 = vsel %vm1093, %v1596, 0.0
        %1617 = vadd.xlane.f32.xlu0 %v1616
        %v1618 = vpop.xlane.xlu0 %1617
        %v1619 = vsel %vm1093, %v1597, 0.0
        %1620 = vadd.xlane.f32.xlu0 %v1619
        %v1621 = vpop.xlane.xlu0 %1620
        %v1622 = vsel %vm1093, %v1598, 0.0
        %1623 = vadd.xlane.f32.xlu0 %v1622
        %v1624 = vpop.xlane.xlu0 %1623
        %v1625 = vmul.f32 %v1603, %v1560
        %v1626 = vmul.f32 %v1606, %v1560
        %v1627 = vmul.f32 %v1609, %v1560
        %v1628 = vmul.f32 %v1612, %v1560
        %v1629 = vmul.f32 %v1615, %v1560
        %v1630 = vmul.f32 %v1618, %v1560
        %v1631 = vmul.f32 %v1621, %v1560
        %v1632 = vmul.f32 %v1624, %v1560
        %v1633 = vmul.f32 %v1591, %v1591
        %v1634 = vmul.f32 %v1592, %v1592
        %v1635 = vmul.f32 %v1593, %v1593
        %v1636 = vmul.f32 %v1594, %v1594
        %v1637 = vmul.f32 %v1595, %v1595
        %v1638 = vmul.f32 %v1596, %v1596
        %v1639 = vmul.f32 %v1597, %v1597
        %v1640 = vmul.f32 %v1598, %v1598
        %v1641 = vsel %vm1093, %v1633, 0.0
        %1642 = vadd.xlane.f32.xlu0 %v1641
        %v1643 = vpop.xlane.xlu0 %1642
        %v1644 = vsel %vm1093, %v1634, 0.0
        %1645 = vadd.xlane.f32.xlu0 %v1644
        %v1646 = vpop.xlane.xlu0 %1645
        %v1647 = vsel %vm1093, %v1635, 0.0
        %1648 = vadd.xlane.f32.xlu0 %v1647
        %v1649 = vpop.xlane.xlu0 %1648
        %v1650 = vsel %vm1093, %v1636, 0.0
        %1651 = vadd.xlane.f32.xlu0 %v1650
        %v1652 = vpop.xlane.xlu0 %1651
        %v1653 = vsel %vm1093, %v1637, 0.0
        %1654 = vadd.xlane.f32.xlu0 %v1653
        %v1655 = vpop.xlane.xlu0 %1654
        %v1656 = vsel %vm1093, %v1638, 0.0
        %1657 = vadd.xlane.f32.xlu0 %v1656
        %v1658 = vpop.xlane.xlu0 %1657
        %v1659 = vsel %vm1093, %v1639, 0.0
        %1660 = vadd.xlane.f32.xlu0 %v1659
        %v1661 = vpop.xlane.xlu0 %1660
        %v1662 = vsel %vm1093, %v1640, 0.0
        %1663 = vadd.xlane.f32.xlu0 %v1662
        %v1664 = vpop.xlane.xlu0 %1663
        %v1665 = vmul.f32 %v1643, %v1560
        %v1666 = vmul.f32 %v1646, %v1560
        %v1667 = vmul.f32 %v1649, %v1560
        %v1668 = vmul.f32 %v1652, %v1560
        %v1669 = vmul.f32 %v1655, %v1560
        %v1670 = vmul.f32 %v1658, %v1560
        %v1671 = vmul.f32 %v1661, %v1560
        %v1672 = vmul.f32 %v1664, %v1560
        %v1673 = vmul.f32 %v1625, %v1625
        %v1674 = vmul.f32 %v1626, %v1626
        %v1675 = vmul.f32 %v1627, %v1627
        %v1676 = vmul.f32 %v1628, %v1628
        %v1677 = vmul.f32 %v1629, %v1629
        %v1678 = vmul.f32 %v1630, %v1630
        %v1679 = vmul.f32 %v1631, %v1631
        %v1680 = vmul.f32 %v1632, %v1632
        %v1681 = vsub.f32 %v1665, %v1673
        %v1682 = vsub.f32 %v1666, %v1674
        %v1683 = vsub.f32 %v1667, %v1675
        %v1684 = vsub.f32 %v1668, %v1676
        %v1685 = vsub.f32 %v1669, %v1677
        %v1686 = vsub.f32 %v1670, %v1678
        %v1687 = vsub.f32 %v1671, %v1679
        %v1688 = vsub.f32 %v1672, %v1680
        %v1689 = vmax.f32 %v1681, 0.0
        %v1690 = vmax.f32 %v1682, 0.0
        %v1691 = vmax.f32 %v1683, 0.0
        %v1692 = vmax.f32 %v1684, 0.0
        %v1693 = vmax.f32 %v1685, 0.0
        %v1694 = vmax.f32 %v1686, 0.0
        %v1695 = vmax.f32 %v1687, 0.0
        %v1696 = vmax.f32 %v1688, 0.0
        %v1697 = vsub.f32 %v1591, %v1625
        %v1698 = vsub.f32 %v1592, %v1626
        %v1699 = vsub.f32 %v1593, %v1627
        %v1700 = vsub.f32 %v1594, %v1628
        %v1701 = vsub.f32 %v1595, %v1629
        %v1702 = vsub.f32 %v1596, %v1630
        %v1703 = vsub.f32 %v1597, %v1631
        %v1704 = vsub.f32 %v1598, %v1632
        %v1705 = vadd.f32 %v1689, 1e-05
        %v1706 = vadd.f32 %v1690, 1e-05
        %v1707 = vadd.f32 %v1691, 1e-05
        %v1708 = vadd.f32 %v1692, 1e-05
        %v1709 = vadd.f32 %v1693, 1e-05
        %v1710 = vadd.f32 %v1694, 1e-05
        %v1711 = vadd.f32 %v1695, 1e-05
        %v1712 = vadd.f32 %v1696, 1e-05
        %v1713 = vrsqrt.pop %v1705
        %v1714 = vmul.f32 %v1713, %v1705
        %v1715 = vmul.f32 %v1714, %v1713
        %v1716 = vmul.f32 0.5, %v1715
        %v1717 = vsub.f32 1.5, %v1716
        %v1718 = vmul.f32 %v1713, %v1717
        %vm1719 = vweird.f32 %v1705
        %vm1720 = vweird.f32 %v1713
        %vm1721 = vmor %vm1719, %vm1720
        %v1722 = vsel %vm1721, %v1713, %v1718
        %v1723 = vrsqrt.pop %v1706
        %v1724 = vmul.f32 %v1723, %v1706
        %v1725 = vmul.f32 %v1724, %v1723
        %v1726 = vmul.f32 0.5, %v1725
        %v1727 = vsub.f32 1.5, %v1726
        %v1728 = vmul.f32 %v1723, %v1727
        %vm1729 = vweird.f32 %v1706
        %vm1730 = vweird.f32 %v1723
        %vm1731 = vmor %vm1729, %vm1730
        %v1732 = vsel %vm1731, %v1723, %v1728
        %v1733 = vrsqrt.pop %v1707
        %v1734 = vmul.f32 %v1733, %v1707
        %v1735 = vmul.f32 %v1734, %v1733
        %v1736 = vmul.f32 0.5, %v1735
        %v1737 = vsub.f32 1.5, %v1736
        %v1738 = vmul.f32 %v1733, %v1737
        %vm1739 = vweird.f32 %v1707
        %vm1740 = vweird.f32 %v1733
        %vm1741 = vmor %vm1739, %vm1740
        %v1742 = vsel %vm1741, %v1733, %v1738
        %v1743 = vrsqrt.pop %v1708
        %v1744 = vmul.f32 %v1743, %v1708
        %v1745 = vmul.f32 %v1744, %v1743
        %v1746 = vmul.f32 0.5, %v1745
        %v1747 = vsub.f32 1.5, %v1746
        %v1748 = vmul.f32 %v1743, %v1747
        %vm1749 = vweird.f32 %v1708
        %vm1750 = vweird.f32 %v1743
        %vm1751 = vmor %vm1749, %vm1750
        %v1752 = vsel %vm1751, %v1743, %v1748
        %v1753 = vrsqrt.pop %v1709
        %v1754 = vmul.f32 %v1753, %v1709
        %v1755 = vmul.f32 %v1754, %v1753
        %v1756 = vmul.f32 0.5, %v1755
        %v1757 = vsub.f32 1.5, %v1756
        %v1758 = vmul.f32 %v1753, %v1757
        %vm1759 = vweird.f32 %v1709
        %vm1760 = vweird.f32 %v1753
        %vm1761 = vmor %vm1759, %vm1760
        %v1762 = vsel %vm1761, %v1753, %v1758
        %v1763 = vrsqrt.pop %v1710
        %v1764 = vmul.f32 %v1763, %v1710
        %v1765 = vmul.f32 %v1764, %v1763
        %v1766 = vmul.f32 0.5, %v1765
        %v1767 = vsub.f32 1.5, %v1766
        %v1768 = vmul.f32 %v1763, %v1767
        %vm1769 = vweird.f32 %v1710
        %vm1770 = vweird.f32 %v1763
        %vm1771 = vmor %vm1769, %vm1770
        %v1772 = vsel %vm1771, %v1763, %v1768
        %v1773 = vrsqrt.pop %v1711
        %v1774 = vmul.f32 %v1773, %v1711
        %v1775 = vmul.f32 %v1774, %v1773
        %v1776 = vmul.f32 0.5, %v1775
        %v1777 = vsub.f32 1.5, %v1776
        %v1778 = vmul.f32 %v1773, %v1777
        %vm1779 = vweird.f32 %v1711
        %vm1780 = vweird.f32 %v1773
        %vm1781 = vmor %vm1779, %vm1780
        %v1782 = vsel %vm1781, %v1773, %v1778
        %v1783 = vrsqrt.pop %v1712
        %v1784 = vmul.f32 %v1783, %v1712
        %v1785 = vmul.f32 %v1784, %v1783
        %v1786 = vmul.f32 0.5, %v1785
        %v1787 = vsub.f32 1.5, %v1786
        %v1788 = vmul.f32 %v1783, %v1787
        %vm1789 = vweird.f32 %v1712
        %vm1790 = vweird.f32 %v1783
        %vm1791 = vmor %vm1789, %vm1790
        %v1792 = vsel %vm1791, %v1783, %v1788
        %v1793 = vmul.f32 %v1697, %v1722
        %v1794 = vmul.f32 %v1698, %v1732
        %v1795 = vmul.f32 %v1699, %v1742
        %v1796 = vmul.f32 %v1700, %v1752
        %v1797 = vmul.f32 %v1701, %v1762
        %v1798 = vmul.f32 %v1702, %v1772
        %v1799 = vmul.f32 %v1703, %v1782
        %v1800 = vmul.f32 %v1704, %v1792
        %v1802 = vperm.slane %v1599, 0
        %v1804 = vmul.f32 %v1793, %v1802
        %v1805 = vmul.f32 %v1794, %v1802
        %v1806 = vmul.f32 %v1795, %v1802
        %v1807 = vmul.f32 %v1796, %v1802
        %v1808 = vmul.f32 %v1797, %v1802
        %v1809 = vmul.f32 %v1798, %v1802
        %v1810 = vmul.f32 %v1799, %v1802
        %v1811 = vmul.f32 %v1800, %v1802
        %v1813 = vperm.slane %v1600, 0
        %v1815 = vadd.f32 %v1804, %v1813
        %v1816 = vadd.f32 %v1805, %v1813
        %v1817 = vadd.f32 %v1806, %v1813
        %v1818 = vadd.f32 %v1807, %v1813
        %v1819 = vadd.f32 %v1808, %v1813
        %v1820 = vadd.f32 %v1809, %v1813
        %v1821 = vadd.f32 %v1810, %v1813
        %v1822 = vadd.f32 %v1811, %v1813
        %v1823 = vld [vmem:[%s33] sm:$0xff]
        %v1824 = vld [vmem:[%s33 + $0x8] sm:$0xff]
        %v1825 = vld [vmem:[%s33 + $0x10] sm:$0xff]
        %v1826 = vld [vmem:[%s33 + $0x18] sm:$0xff]
        %v1827 = vld [vmem:[%s35] sm:$0x1]
        %v1829 = vperm.slane %v1827, 0
        %v1832 = vsel %vm1093, %v1590, 0
        %1834 = vmatpush.msra.mxu0 0.0
        %1835 = vmatpush.msra.mxu0 0.0
        %1836 = vmatpush.msra.mxu0 0.0
        %1837 = vmatpush.msra.mxu0 0.0
        %1838 = vmatpush.msra.mxu0 0.0
        %1839 = vmatpush.msra.mxu0 0.0
        %1840 = vmatpush.msra.mxu0 0.0
        %1841 = vmatpush.msra.mxu0 0.0
        %1842 = vmatpush.msra.mxu0 0.0
        %1843 = vmatpush.msra.mxu0 0.0
        %1844 = vmatpush.msra.mxu0 0.0
        %1845 = vmatpush.msra.mxu0 0.0
        %1846 = vmatpush.msra.mxu0 %v1826
        %1847 = vmatpush.msra.mxu0 %v1825
        %1848 = vmatpush.msra.mxu0 %v1824
        %1849 = vmatpush.msra.mxu0 %v1823
        %1850 = vmatmul.f32.gmra.mxu0 %v1832
        %v1851 = vpop.f32.mrf.mxu0
        %v1852 = vadd.f32 %v1829, %v1851
        %1853 = vdwg.mxu0
        %v1854 = vmax.f32 %v1852, 0.0
        %v1855 = vld [vmem:[%s37] sm:$0xff]
        %v1856 = vld [vmem:[%s37 + $0x8] sm:$0xff]
        %v1857 = vld [vmem:[%s37 + $0x10] sm:$0xff]
        %v1858 = vld [vmem:[%s37 + $0x18] sm:$0xff]
        %v1859 = vld [vmem:[%s37 + $0x20] sm:$0xff]
        %v1860 = vld [vmem:[%s37 + $0x28] sm:$0xff]
        %v1861 = vld [vmem:[%s37 + $0x30] sm:$0xff]
        %v1862 = vld [vmem:[%s37 + $0x38] sm:$0xff]
        %v1863 = vld [vmem:[%s37 + $0x40] sm:$0xff]
        %v1864 = vld [vmem:[%s37 + $0x48] sm:$0xff]
        %v1865 = vld [vmem:[%s37 + $0x50] sm:$0xff]
        %v1866 = vld [vmem:[%s37 + $0x58] sm:$0xff]
        %v1867 = vld [vmem:[%s37 + $0x60] sm:$0xff]
        %v1868 = vld [vmem:[%s37 + $0x68] sm:$0xff]
        %v1869 = vld [vmem:[%s37 + $0x70] sm:$0xff]
        %v1870 = vld [vmem:[%s37 + $0x78] sm:$0xff]
        %v1871 = vld [vmem:[%s39] sm:$0x1]
        %v1873 = vperm.slane %v1871, 0
        %1875 = vmatpush.msra.mxu0 %v1870
        %1876 = vmatpush.msra.mxu0 %v1869
        %1877 = vmatpush.msra.mxu0 %v1868
        %1878 = vmatpush.msra.mxu0 %v1867
        %1879 = vmatpush.msra.mxu0 %v1866
        %1880 = vmatpush.msra.mxu0 %v1865
        %1881 = vmatpush.msra.mxu0 %v1864
        %1882 = vmatpush.msra.mxu0 %v1863
        %1883 = vmatpush.msra.mxu0 %v1862
        %1884 = vmatpush.msra.mxu0 %v1861
        %1885 = vmatpush.msra.mxu0 %v1860
        %1886 = vmatpush.msra.mxu0 %v1859
        %1887 = vmatpush.msra.mxu0 %v1858
        %1888 = vmatpush.msra.mxu0 %v1857
        %1889 = vmatpush.msra.mxu0 %v1856
        %1890 = vmatpush.msra.mxu0 %v1855
        %1891 = vmatmul.f32.gmra.mxu0 %v1854
        %v1892 = vpop.f32.mrf.mxu0
        %v1893 = vadd.f32 %v1873, %v1892
        %1894 = vdwg.mxu0
        %v1895 = vadd.f32 %v1590, %v1893
        %v1896 = vld [vmem:[%s49] sm:$0x1]
        %v1897 = vld [vmem:[%s51] sm:$0x1]
        %v1898 = vsel %vm1093, %v1895, 0.0
        %1899 = vadd.xlane.f32.xlu0 %v1898
        %v1900 = vpop.xlane.xlu0 %1899
        %v1901 = vmul.f32 %v1900, %v1560
        %v1902 = vmul.f32 %v1895, %v1895
        %v1903 = vsel %vm1093, %v1902, 0.0
        %1904 = vadd.xlane.f32.xlu0 %v1903
        %v1905 = vpop.xlane.xlu0 %1904
        %v1906 = vmul.f32 %v1905, %v1560
        %v1907 = vmul.f32 %v1901, %v1901
        %v1908 = vsub.f32 %v1906, %v1907
        %v1909 = vmax.f32 %v1908, 0.0
        %v1910 = vsub.f32 %v1895, %v1901
        %v1911 = vadd.f32 %v1909, 1e-05
        %v1912 = vrsqrt.pop %v1911
        %v1913 = vmul.f32 %v1912, %v1911
        %v1914 = vmul.f32 %v1913, %v1912
        %v1915 = vmul.f32 0.5, %v1914
        %v1916 = vsub.f32 1.5, %v1915
        %v1917 = vmul.f32 %v1912, %v1916
        %vm1918 = vweird.f32 %v1911
        %vm1919 = vweird.f32 %v1912
        %vm1920 = vmor %vm1918, %vm1919
        %v1921 = vsel %vm1920, %v1912, %v1917
        %v1922 = vmul.f32 %v1910, %v1921
        %v1924 = vperm.slane %v1896, 0
        %v1926 = vmul.f32 %v1922, %v1924
        %v1928 = vperm.slane %v1897, 0
        %v1930 = vadd.f32 %v1926, %v1928
        %v1931 = vld [vmem:[%s41] sm:$0xff]
        %v1932 = vld [vmem:[%s41 + $0x8] sm:$0xff]
        %v1933 = vld [vmem:[%s41 + $0x10] sm:$0xff]
        %v1934 = vld [vmem:[%s41 + $0x18] sm:$0xff]
        %v1935 = vld [vmem:[%s43] sm:$0x1]
        %v1937 = vperm.slane %v1935, 0
        %v1940 = vsel %vm1093, %v1815, 0
        %v1943 = vsel %vm1093, %v1816, 0
        %v1946 = vsel %vm1093, %v1817, 0
        %v1949 = vsel %vm1093, %v1818, 0
        %v1952 = vsel %vm1093, %v1819, 0
        %v1955 = vsel %vm1093, %v1820, 0
        %v1958 = vsel %vm1093, %v1821, 0
        %v1961 = vsel %vm1093, %v1822, 0
        %1963 = vmatpush.msra.mxu0 0.0
        %1964 = vmatpush.msra.mxu0 0.0
        %1965 = vmatpush.msra.mxu0 0.0
        %1966 = vmatpush.msra.mxu0 0.0
        %1967 = vmatpush.msra.mxu0 0.0
        %1968 = vmatpush.msra.mxu0 0.0
        %1969 = vmatpush.msra.mxu0 0.0
        %1970 = vmatpush.msra.mxu0 0.0
        %1971 = vmatpush.msra.mxu0 0.0
        %1972 = vmatpush.msra.mxu0 0.0
        %1973 = vmatpush.msra.mxu0 0.0
        %1974 = vmatpush.msra.mxu0 0.0
        %1975 = vmatpush.msra.mxu0 %v1934
        %1976 = vmatpush.msra.mxu0 %v1933
        %1977 = vmatpush.msra.mxu0 %v1932
        %1978 = vmatpush.msra.mxu0 %v1931
        %1979 = vmatmul.f32.gmra.mxu0 %v1940
        %v1980 = vpop.f32.mrf.mxu0
        %v1981 = vadd.f32 %v1937, %v1980
        %1982 = vmatmul.f32.gmra.mxu0 %v1943
        %v1983 = vpop.f32.mrf.mxu0
        %v1984 = vadd.f32 %v1937, %v1983
        %1985 = vmatmul.f32.gmra.mxu0 %v1946
        %v1986 = vpop.f32.mrf.mxu0
        %v1987 = vadd.f32 %v1937, %v1986
        %1988 = vmatmul.f32.gmra.mxu0 %v1949
        %v1989 = vpop.f32.mrf.mxu0
        %v1990 = vadd.f32 %v1937, %v1989
        %1991 = vmatmul.f32.gmra.mxu0 %v1952
        %v1992 = vpop.f32.mrf.mxu0
        %v1993 = vadd.f32 %v1937, %v1992
        %1994 = vmatmul.f32.gmra.mxu0 %v1955
        %v1995 = vpop.f32.mrf.mxu0
        %v1996 = vadd.f32 %v1937, %v1995
        %1997 = vmatmul.f32.gmra.mxu0 %v1958
        %v1998 = vpop.f32.mrf.mxu0
        %v1999 = vadd.f32 %v1937, %v1998
        %2000 = vmatmul.f32.gmra.mxu0 %v1961
        %v2001 = vpop.f32.mrf.mxu0
        %v2002 = vadd.f32 %v1937, %v2001
        %2003 = vdwg.mxu0
        %v2004 = vmax.f32 %v1981, 0.0
        %v2005 = vmax.f32 %v1984, 0.0
        %v2006 = vmax.f32 %v1987, 0.0
        %v2007 = vmax.f32 %v1990, 0.0
        %v2008 = vmax.f32 %v1993, 0.0
        %v2009 = vmax.f32 %v1996, 0.0
        %v2010 = vmax.f32 %v1999, 0.0
        %v2011 = vmax.f32 %v2002, 0.0
        %v2012 = vld [vmem:[%s45] sm:$0xff]
        %v2013 = vld [vmem:[%s45 + $0x8] sm:$0xff]
        %v2014 = vld [vmem:[%s45 + $0x10] sm:$0xff]
        %v2015 = vld [vmem:[%s45 + $0x18] sm:$0xff]
        %v2016 = vld [vmem:[%s45 + $0x20] sm:$0xff]
        %v2017 = vld [vmem:[%s45 + $0x28] sm:$0xff]
        %v2018 = vld [vmem:[%s45 + $0x30] sm:$0xff]
        %v2019 = vld [vmem:[%s45 + $0x38] sm:$0xff]
        %v2020 = vld [vmem:[%s45 + $0x40] sm:$0xff]
        %v2021 = vld [vmem:[%s45 + $0x48] sm:$0xff]
        %v2022 = vld [vmem:[%s45 + $0x50] sm:$0xff]
        %v2023 = vld [vmem:[%s45 + $0x58] sm:$0xff]
        %v2024 = vld [vmem:[%s45 + $0x60] sm:$0xff]
        %v2025 = vld [vmem:[%s45 + $0x68] sm:$0xff]
        %v2026 = vld [vmem:[%s45 + $0x70] sm:$0xff]
        %v2027 = vld [vmem:[%s45 + $0x78] sm:$0xff]
        %v2028 = vld [vmem:[%s47] sm:$0x1]
        %v2030 = vperm.slane %v2028, 0
        %2032 = vmatpush.msra.mxu0 %v2027
        %2033 = vmatpush.msra.mxu0 %v2026
        %2034 = vmatpush.msra.mxu0 %v2025
        %2035 = vmatpush.msra.mxu0 %v2024
        %2036 = vmatpush.msra.mxu0 %v2023
        %2037 = vmatpush.msra.mxu0 %v2022
        %2038 = vmatpush.msra.mxu0 %v2021
        %2039 = vmatpush.msra.mxu0 %v2020
        %2040 = vmatpush.msra.mxu0 %v2019
        %2041 = vmatpush.msra.mxu0 %v2018
        %2042 = vmatpush.msra.mxu0 %v2017
        %2043 = vmatpush.msra.mxu0 %v2016
        %2044 = vmatpush.msra.mxu0 %v2015
        %2045 = vmatpush.msra.mxu0 %v2014
        %2046 = vmatpush.msra.mxu0 %v2013
        %2047 = vmatpush.msra.mxu0 %v2012
        %2048 = vmatmul.f32.gmra.mxu0 %v2004
        %v2049 = vpop.f32.mrf.mxu0
        %v2050 = vadd.f32 %v2030, %v2049
        %2051 = vmatmul.f32.gmra.mxu0 %v2005
        %v2052 = vpop.f32.mrf.mxu0
        %v2053 = vadd.f32 %v2030, %v2052
        %2054 = vmatmul.f32.gmra.mxu0 %v2006
        %v2055 = vpop.f32.mrf.mxu0
        %v2056 = vadd.f32 %v2030, %v2055
        %2057 = vmatmul.f32.gmra.mxu0 %v2007
        %v2058 = vpop.f32.mrf.mxu0
        %v2059 = vadd.f32 %v2030, %v2058
        %2060 = vmatmul.f32.gmra.mxu0 %v2008
        %v2061 = vpop.f32.mrf.mxu0
        %v2062 = vadd.f32 %v2030, %v2061
        %2063 = vmatmul.f32.gmra.mxu0 %v2009
        %v2064 = vpop.f32.mrf.mxu0
        %v2065 = vadd.f32 %v2030, %v2064
        %2066 = vmatmul.f32.gmra.mxu0 %v2010
        %v2067 = vpop.f32.mrf.mxu0
        %v2068 = vadd.f32 %v2030, %v2067
        %2069 = vmatmul.f32.gmra.mxu0 %v2011
        %v2070 = vpop.f32.mrf.mxu0
        %v2071 = vadd.f32 %v2030, %v2070
        %2072 = vdwg.mxu0
        %v2073 = vadd.f32 %v1815, %v2050
        %v2074 = vadd.f32 %v1816, %v2053
        %v2075 = vadd.f32 %v1817, %v2056
        %v2076 = vadd.f32 %v1818, %v2059
        %v2077 = vadd.f32 %v1819, %v2062
        %v2078 = vadd.f32 %v1820, %v2065
        %v2079 = vadd.f32 %v1821, %v2068
        %v2080 = vadd.f32 %v1822, %v2071
        %v2081 = vld [vmem:[%s53] sm:$0x1]
        %v2082 = vld [vmem:[%s55] sm:$0x1]
        %v2083 = vsel %vm1093, %v2073, 0.0
        %2084 = vadd.xlane.f32.xlu0 %v2083
        %v2085 = vpop.xlane.xlu0 %2084
        %v2086 = vsel %vm1093, %v2074, 0.0
        %2087 = vadd.xlane.f32.xlu0 %v2086
        %v2088 = vpop.xlane.xlu0 %2087
        %v2089 = vsel %vm1093, %v2075, 0.0
        %2090 = vadd.xlane.f32.xlu0 %v2089
        %v2091 = vpop.xlane.xlu0 %2090
        %v2092 = vsel %vm1093, %v2076, 0.0
        %2093 = vadd.xlane.f32.xlu0 %v2092
        %v2094 = vpop.xlane.xlu0 %2093
        %v2095 = vsel %vm1093, %v2077, 0.0
        %2096 = vadd.xlane.f32.xlu0 %v2095
        %v2097 = vpop.xlane.xlu0 %2096
        %v2098 = vsel %vm1093, %v2078, 0.0
        %2099 = vadd.xlane.f32.xlu0 %v2098
        %v2100 = vpop.xlane.xlu0 %2099
        %v2101 = vsel %vm1093, %v2079, 0.0
        %2102 = vadd.xlane.f32.xlu0 %v2101
        %v2103 = vpop.xlane.xlu0 %2102
        %v2104 = vsel %vm1093, %v2080, 0.0
        %2105 = vadd.xlane.f32.xlu0 %v2104
        %v2106 = vpop.xlane.xlu0 %2105
        %v2107 = vmul.f32 %v2085, %v1560
        %v2108 = vmul.f32 %v2088, %v1560
        %v2109 = vmul.f32 %v2091, %v1560
        %v2110 = vmul.f32 %v2094, %v1560
        %v2111 = vmul.f32 %v2097, %v1560
        %v2112 = vmul.f32 %v2100, %v1560
        %v2113 = vmul.f32 %v2103, %v1560
        %v2114 = vmul.f32 %v2106, %v1560
        %v2115 = vmul.f32 %v2073, %v2073
        %v2116 = vmul.f32 %v2074, %v2074
        %v2117 = vmul.f32 %v2075, %v2075
        %v2118 = vmul.f32 %v2076, %v2076
        %v2119 = vmul.f32 %v2077, %v2077
        %v2120 = vmul.f32 %v2078, %v2078
        %v2121 = vmul.f32 %v2079, %v2079
        %v2122 = vmul.f32 %v2080, %v2080
        %v2123 = vsel %vm1093, %v2115, 0.0
        %2124 = vadd.xlane.f32.xlu0 %v2123
        %v2125 = vpop.xlane.xlu0 %2124
        %v2126 = vsel %vm1093, %v2116, 0.0
        %2127 = vadd.xlane.f32.xlu0 %v2126
        %v2128 = vpop.xlane.xlu0 %2127
        %v2129 = vsel %vm1093, %v2117, 0.0
        %2130 = vadd.xlane.f32.xlu0 %v2129
        %v2131 = vpop.xlane.xlu0 %2130
        %v2132 = vsel %vm1093, %v2118, 0.0
        %2133 = vadd.xlane.f32.xlu0 %v2132
        %v2134 = vpop.xlane.xlu0 %2133
        %v2135 = vsel %vm1093, %v2119, 0.0
        %2136 = vadd.xlane.f32.xlu0 %v2135
        %v2137 = vpop.xlane.xlu0 %2136
        %v2138 = vsel %vm1093, %v2120, 0.0
        %2139 = vadd.xlane.f32.xlu0 %v2138
        %v2140 = vpop.xlane.xlu0 %2139
        %v2141 = vsel %vm1093, %v2121, 0.0
        %2142 = vadd.xlane.f32.xlu0 %v2141
        %v2143 = vpop.xlane.xlu0 %2142
        %v2144 = vsel %vm1093, %v2122, 0.0
        %2145 = vadd.xlane.f32.xlu0 %v2144
        %v2146 = vpop.xlane.xlu0 %2145
        %v2147 = vmul.f32 %v2125, %v1560
        %v2148 = vmul.f32 %v2128, %v1560
        %v2149 = vmul.f32 %v2131, %v1560
        %v2150 = vmul.f32 %v2134, %v1560
        %v2151 = vmul.f32 %v2137, %v1560
        %v2152 = vmul.f32 %v2140, %v1560
        %v2153 = vmul.f32 %v2143, %v1560
        %v2154 = vmul.f32 %v2146, %v1560
        %v2155 = vmul.f32 %v2107, %v2107
        %v2156 = vmul.f32 %v2108, %v2108
        %v2157 = vmul.f32 %v2109, %v2109
        %v2158 = vmul.f32 %v2110, %v2110
        %v2159 = vmul.f32 %v2111, %v2111
        %v2160 = vmul.f32 %v2112, %v2112
        %v2161 = vmul.f32 %v2113, %v2113
        %v2162 = vmul.f32 %v2114, %v2114
        %v2163 = vsub.f32 %v2147, %v2155
        %v2164 = vsub.f32 %v2148, %v2156
        %v2165 = vsub.f32 %v2149, %v2157
        %v2166 = vsub.f32 %v2150, %v2158
        %v2167 = vsub.f32 %v2151, %v2159
        %v2168 = vsub.f32 %v2152, %v2160
        %v2169 = vsub.f32 %v2153, %v2161
        %v2170 = vsub.f32 %v2154, %v2162
        %v2171 = vmax.f32 %v2163, 0.0
        %v2172 = vmax.f32 %v2164, 0.0
        %v2173 = vmax.f32 %v2165, 0.0
        %v2174 = vmax.f32 %v2166, 0.0
        %v2175 = vmax.f32 %v2167, 0.0
        %v2176 = vmax.f32 %v2168, 0.0
        %v2177 = vmax.f32 %v2169, 0.0
        %v2178 = vmax.f32 %v2170, 0.0
        %v2179 = vsub.f32 %v2073, %v2107
        %v2180 = vsub.f32 %v2074, %v2108
        %v2181 = vsub.f32 %v2075, %v2109
        %v2182 = vsub.f32 %v2076, %v2110
        %v2183 = vsub.f32 %v2077, %v2111
        %v2184 = vsub.f32 %v2078, %v2112
        %v2185 = vsub.f32 %v2079, %v2113
        %v2186 = vsub.f32 %v2080, %v2114
        %v2187 = vadd.f32 %v2171, 1e-05
        %v2188 = vadd.f32 %v2172, 1e-05
        %v2189 = vadd.f32 %v2173, 1e-05
        %v2190 = vadd.f32 %v2174, 1e-05
        %v2191 = vadd.f32 %v2175, 1e-05
        %v2192 = vadd.f32 %v2176, 1e-05
        %v2193 = vadd.f32 %v2177, 1e-05
        %v2194 = vadd.f32 %v2178, 1e-05
        %v2195 = vrsqrt.pop %v2187
        %v2196 = vmul.f32 %v2195, %v2187
        %v2197 = vmul.f32 %v2196, %v2195
        %v2198 = vmul.f32 0.5, %v2197
        %v2199 = vsub.f32 1.5, %v2198
        %v2200 = vmul.f32 %v2195, %v2199
        %vm2201 = vweird.f32 %v2187
        %vm2202 = vweird.f32 %v2195
        %vm2203 = vmor %vm2201, %vm2202
        %v2204 = vsel %vm2203, %v2195, %v2200
        %v2205 = vrsqrt.pop %v2188
        %v2206 = vmul.f32 %v2205, %v2188
        %v2207 = vmul.f32 %v2206, %v2205
        %v2208 = vmul.f32 0.5, %v2207
        %v2209 = vsub.f32 1.5, %v2208
        %v2210 = vmul.f32 %v2205, %v2209
        %vm2211 = vweird.f32 %v2188
        %vm2212 = vweird.f32 %v2205
        %vm2213 = vmor %vm2211, %vm2212
        %v2214 = vsel %vm2213, %v2205, %v2210
        %v2215 = vrsqrt.pop %v2189
        %v2216 = vmul.f32 %v2215, %v2189
        %v2217 = vmul.f32 %v2216, %v2215
        %v2218 = vmul.f32 0.5, %v2217
        %v2219 = vsub.f32 1.5, %v2218
        %v2220 = vmul.f32 %v2215, %v2219
        %vm2221 = vweird.f32 %v2189
        %vm2222 = vweird.f32 %v2215
        %vm2223 = vmor %vm2221, %vm2222
        %v2224 = vsel %vm2223, %v2215, %v2220
        %v2225 = vrsqrt.pop %v2190
        %v2226 = vmul.f32 %v2225, %v2190
        %v2227 = vmul.f32 %v2226, %v2225
        %v2228 = vmul.f32 0.5, %v2227
        %v2229 = vsub.f32 1.5, %v2228
        %v2230 = vmul.f32 %v2225, %v2229
        %vm2231 = vweird.f32 %v2190
        %vm2232 = vweird.f32 %v2225
        %vm2233 = vmor %vm2231, %vm2232
        %v2234 = vsel %vm2233, %v2225, %v2230
        %v2235 = vrsqrt.pop %v2191
        %v2236 = vmul.f32 %v2235, %v2191
        %v2237 = vmul.f32 %v2236, %v2235
        %v2238 = vmul.f32 0.5, %v2237
        %v2239 = vsub.f32 1.5, %v2238
        %v2240 = vmul.f32 %v2235, %v2239
        %vm2241 = vweird.f32 %v2191
        %vm2242 = vweird.f32 %v2235
        %vm2243 = vmor %vm2241, %vm2242
        %v2244 = vsel %vm2243, %v2235, %v2240
        %v2245 = vrsqrt.pop %v2192
        %v2246 = vmul.f32 %v2245, %v2192
        %v2247 = vmul.f32 %v2246, %v2245
        %v2248 = vmul.f32 0.5, %v2247
        %v2249 = vsub.f32 1.5, %v2248
        %v2250 = vmul.f32 %v2245, %v2249
        %vm2251 = vweird.f32 %v2192
        %vm2252 = vweird.f32 %v2245
        %vm2253 = vmor %vm2251, %vm2252
        %v2254 = vsel %vm2253, %v2245, %v2250
        %v2255 = vrsqrt.pop %v2193
        %v2256 = vmul.f32 %v2255, %v2193
        %v2257 = vmul.f32 %v2256, %v2255
        %v2258 = vmul.f32 0.5, %v2257
        %v2259 = vsub.f32 1.5, %v2258
        %v2260 = vmul.f32 %v2255, %v2259
        %vm2261 = vweird.f32 %v2193
        %vm2262 = vweird.f32 %v2255
        %vm2263 = vmor %vm2261, %vm2262
        %v2264 = vsel %vm2263, %v2255, %v2260
        %v2265 = vrsqrt.pop %v2194
        %v2266 = vmul.f32 %v2265, %v2194
        %v2267 = vmul.f32 %v2266, %v2265
        %v2268 = vmul.f32 0.5, %v2267
        %v2269 = vsub.f32 1.5, %v2268
        %v2270 = vmul.f32 %v2265, %v2269
        %vm2271 = vweird.f32 %v2194
        %vm2272 = vweird.f32 %v2265
        %vm2273 = vmor %vm2271, %vm2272
        %v2274 = vsel %vm2273, %v2265, %v2270
        %v2275 = vmul.f32 %v2179, %v2204
        %v2276 = vmul.f32 %v2180, %v2214
        %v2277 = vmul.f32 %v2181, %v2224
        %v2278 = vmul.f32 %v2182, %v2234
        %v2279 = vmul.f32 %v2183, %v2244
        %v2280 = vmul.f32 %v2184, %v2254
        %v2281 = vmul.f32 %v2185, %v2264
        %v2282 = vmul.f32 %v2186, %v2274
        %v2284 = vperm.slane %v2081, 0
        %v2286 = vmul.f32 %v2275, %v2284
        %v2287 = vmul.f32 %v2276, %v2284
        %v2288 = vmul.f32 %v2277, %v2284
        %v2289 = vmul.f32 %v2278, %v2284
        %v2290 = vmul.f32 %v2279, %v2284
        %v2291 = vmul.f32 %v2280, %v2284
        %v2292 = vmul.f32 %v2281, %v2284
        %v2293 = vmul.f32 %v2282, %v2284
        %v2295 = vperm.slane %v2082, 0
        %v2297 = vadd.f32 %v2286, %v2295
        %v2298 = vadd.f32 %v2287, %v2295
        %v2299 = vadd.f32 %v2288, %v2295
        %v2300 = vadd.f32 %v2289, %v2295
        %v2301 = vadd.f32 %v2290, %v2295
        %v2302 = vadd.f32 %v2291, %v2295
        %v2303 = vadd.f32 %v2292, %v2295
        %v2304 = vadd.f32 %v2293, %v2295
        %2305 = vst.msk [vmem:[%s936] sm:$0xff] %vm1093, %v1930
        %2306 = vst.msk [vmem:[%s970] sm:$0xff] %vm1093, %v2297
        %2307 = vst.msk [vmem:[%s970 + $0x8] sm:$0xff] %vm1093, %v2298
        %2308 = vst.msk [vmem:[%s970 + $0x10] sm:$0xff] %vm1093, %v2299
        %2309 = vst.msk [vmem:[%s970 + $0x18] sm:$0xff] %vm1093, %v2300
        %2310 = vst.msk [vmem:[%s970 + $0x20] sm:$0xff] %vm1093, %v2301
        %2311 = vst.msk [vmem:[%s970 + $0x28] sm:$0xff] %vm1093, %v2302
        %2312 = vst.msk [vmem:[%s970 + $0x30] sm:$0xff] %vm1093, %v2303
        %2313 = vst.msk [vmem:[%s970 + $0x38] sm:$0xff] %vm1093, %v2304
        %s2314 = sand.u32 %s696, 1
        %s2315 = scalar_lea.sflag [#allocation7], %s2314
        %s2316 = sand.u32 %s696, 1
        %s2317 = smul.addr %s2316, 8
        %s2318 = scalar_lea.vmem [#allocation6], %s2317
        %s2319 = smul.u32 8, %s79
        %p2320 = scmp.lt.s32.totalorder %s78, 1
        %s2321 = scalar_select %p2320, %s78, 1
        %p2322 = scmp.lt.s32.totalorder %s2319, 7
        %s2323 = scalar_select %p2322, %s2319, 7
        %s2324 = smul.addr %s2321, 8
        %s2325 = sadd.s32 %s2323, %s2324
        %s2326 = smul.addr %s2325, 8
        %s2327 = scalar_lea.vmem %s59, %s2326
        // Predicated region
        $region137: #{tpu_custom_call.1} parent=131 // pred_check
          %p2328 = pneg %p706
        $region138: #{tpu_custom_call.1} parent=131 // pred_check_branch
          %2330 = sbr.rel (%p2328) target = $region140
        $region139: #{tpu_custom_call.1} parent=131 // pred_region
          %2332 = vsyncadd %s2315, 0
          %s2333 = sadd.s32 %s79, %s78
          %s2334 = smul.addr %s2333, 8
          %s2335 = scalar_lea.hbm %s57, %s2334
          %s2337 = sshll.u32 %s2318, 4
          %s2338 = int_to_ptr.vmem [resolvable:$true] %s2337
          %s2339 = sshll.u32 %s2335, 4
          %s2340 = int_to_ptr.hbm [resolvable:$true] %s2339
          %2342 = dma.vmem_to_hbm [thread:$0]  %s2338, 128, %s2340, %s2315
        $region140: #{tpu_custom_call.1} parent=131 // pred_fallthru
          _
        // Predicated region
        $region141: #{tpu_custom_call.1} parent=131 // pred_check
          %p2343 = pneg %p734
        $region142: #{tpu_custom_call.1} parent=131 // pred_check_branch
          %2345 = sbr.rel (%p2343) target = $region144
        $region143: #{tpu_custom_call.1} parent=131 // pred_region
          %s2346 = smul.u32 8, %s79
        $region144: #{tpu_custom_call.1} parent=131 // pred_fallthru
          _
      $region132: #{tpu_custom_call.1} parent=5 // pred_fallthru
        _
      %p2347 = scmp.le.s32.totalorder 2, %s69
      // Predicated region
      $region145: #{tpu_custom_call.1} parent=5 // pred_check
        %p2348 = pneg %p2347
      $region146: #{tpu_custom_call.1} parent=5 // pred_check_branch
        %2350 = sbr.rel (%p2348) target = $region148
      $region147: #{tpu_custom_call.1} parent=5 // pred_region
        %s2351 = ssub.s32 %s69, 2
        // Predicated region
        $region149: #{tpu_custom_call.1} parent=147 // pred_check
          %p2352 = pneg %p712
        $region150: #{tpu_custom_call.1} parent=147 // pred_check_branch
          %2354 = sbr.rel (%p2352) target = $region152
        $region151: #{tpu_custom_call.1} parent=147 // pred_region
          %s2355 = sand.u32 %s697, 1
          %s2356 = scalar_lea.sflag [#allocation7], %s2355
          %s2357 = sand.u32 %s697, 1
          %s2358 = smul.addr %s2357, 8
          %s2359 = scalar_lea.vmem [#allocation6], %s2358
          %2361 = dma.done %s2356, 128
        $region152: #{tpu_custom_call.1} parent=147 // pred_fallthru
          _
        // Predicated region
        $region153: #{tpu_custom_call.1} parent=147 // pred_check
          %p2362 = pneg %p740
        $region154: #{tpu_custom_call.1} parent=147 // pred_check_branch
          %2364 = sbr.rel (%p2362) target = $region156
        $region155: #{tpu_custom_call.1} parent=147 // pred_region
          %s2365 = smul.u32 8, %s81
          %p2366 = scmp.lt.s32.totalorder %s80, 1
          %s2367 = scalar_select %p2366, %s80, 1
          %p2368 = scmp.lt.s32.totalorder %s2365, 7
          %s2369 = scalar_select %p2368, %s2365, 7
          %s2370 = smul.addr %s2367, 8
          %s2371 = sadd.s32 %s2369, %s2370
          %s2372 = smul.addr %s2371, 8
          %s2373 = scalar_lea.vmem %s59, %s2372
        $region156: #{tpu_custom_call.1} parent=147 // pred_fallthru
          _
      $region148: #{tpu_custom_call.1} parent=5 // pred_fallthru
        _
    $region6: #{tpu_custom_call.1} parent=1 // loop_footer
      %s73 = sadd.s32 1, %s69
    $region7: #{tpu_custom_call.1} parent=1 // loop_footer_branch
      %68 = sbr.rel target = $region3
    $region8: #{tpu_custom_call.1} parent=1 // loop_exit
      _
    %2374 = vsyncpa [#allocation7], 1
    %s2375 = scalar_lea.sflag [#allocation7], 1
    %2376 = vsyncpa %s2375, 1

</llo_original>
